<compile_context>
chip_gen: v5e
topology: v5e:2x2
jax: 0.10.0
libtpu: 0.0.40
codegen_flags: <defaults>
</compile_context>

<pallas_src>
import functools

import jax
import jax.numpy as jnp
import numpy as np
from jax.experimental import pallas as pl
from jax.experimental.pallas import tpu as pltpu

# "hparams" used by the original module (synthetic, deterministic constants).
HPARAMS = dict(quantize_channels=256, log_scale_min=-7.0)


def _dml_loss_kernel(y_ref, tgt_ref, mask_ref, out_ref, *, num_classes, log_scale_min):
    """Grid = (P parallel slices over T, reduction over T tiles within a slice).

    y_ref   : (B, 3, nm, tt)   [logits | means | log_scales] along axis 1
    tgt_ref : (B, 1, tt)
    mask_ref: (B, 1, tt) float {0,1}
    out_ref : (1, B, 1, tt)    per-parallel-slice, per-lane partial loss sums (resident accumulator)
    """
    t = pl.program_id(1)

    @pl.when(t == 0)
    def _init():
        out_ref[...] = jnp.zeros_like(out_ref)

    yv = y_ref[...].astype(jnp.float32)                 # (B, 3, nm, tt), single upcast in VMEM
    logit = yv[:, 0]                                    # (B, nm, tt)  -- leading-axis slice, aligned
    means = yv[:, 1]
    log_scales = jnp.maximum(yv[:, 2], log_scale_min)

    y = tgt_ref[...].astype(jnp.float32)                # (B, 1, tt) -> broadcasts over nm (sublanes)
    msk = mask_ref[...].astype(jnp.float32)             # (B, 1, tt)

    inv_stdv = jnp.exp(-log_scales)
    centered = y - means
    mid_in = inv_stdv * centered
    half_bin_scaled = inv_stdv * (1.0 / (num_classes - 1))
    plus_in = mid_in + half_bin_scaled
    min_in = mid_in - half_bin_scaled

    sp_plus = jax.nn.softplus(plus_in)
    sp_min = jax.nn.softplus(min_in)
    log_cdf_plus = plus_in - sp_plus                    # log sigmoid(plus_in)
    log_one_minus_cdf_min = -sp_min                     # log(1 - sigmoid(min_in))
    # sigmoid(x) = exp(x - softplus(x)); reuse the softplus already computed (saves 2 EUP recips)
    cdf_delta = jnp.exp(log_cdf_plus) - jnp.exp(min_in - sp_min)
    log_pdf_mid = mid_in - log_scales - 2.0 * jax.nn.softplus(mid_in)

    inner_inner = jnp.where(
        cdf_delta > 1e-5,
        jnp.log(jnp.maximum(cdf_delta, 1e-12)),
        log_pdf_mid - np.log((num_classes - 1) / 2.0),
    )
    inner = jnp.where(y > 0.999, log_one_minus_cdf_min, inner_inner)
    log_probs = jnp.where(y < -0.999, log_cdf_plus, inner)          # (B, nm, tt)

    # losses = -logsumexp(log_probs + log_softmax(logit), axis=mix)
    #        =  logsumexp(logit) - logsumexp(log_probs + logit)     (fold: one fewer broadcast-sub)
    z = log_probs + logit
    m1 = jnp.max(z, axis=1, keepdims=True)
    lse1 = jnp.log(jnp.sum(jnp.exp(z - m1), axis=1, keepdims=True)) + m1
    m2 = jnp.max(logit, axis=1, keepdims=True)
    lse2 = jnp.log(jnp.sum(jnp.exp(logit - m2), axis=1, keepdims=True)) + m2
    losses = lse2 - lse1                                             # (B, 1, tt)

    # masked, per-lane accumulation into the resident output block (pure VPU add; no per-step
    # scalar reduce, no loop-carried 1-element dependency). where() keeps padded lanes NaN-free.
    masked = jnp.where(msk > 0.5, losses, 0.0)
    out_ref[...] += jnp.expand_dims(masked, 0)                       # (1, B, 1, tt)


def discretized_mixture_logistic_loss(y_hat, target, lengths=None, mask=None, max_len=None,
                                      num_classes=HPARAMS["quantize_channels"],
                                      log_scale_min=HPARAMS["log_scale_min"],
                                      tile_t=512, num_parallel=2):
    """y_hat: (B, 3*nr_mix, T) (any float dtype); target: (B, T, 1) in [-1, 1];
    lengths: (B,) int or mask: (B, T, 1). Returns a scalar matching the PyTorch forward."""
    if lengths is None and mask is None:
        raise RuntimeError("Should provide either lengths or mask")

    B, C, T = y_hat.shape
    assert C % 3 == 0
    nm = C // 3
    assert target.shape == (B, T, 1)

    # Build / reorient the mask to (B, 1, T), lane-dense over time.
    if mask is None:
        if max_len is None:
            max_len = T
        seq_range = jnp.arange(max_len, dtype=jnp.int32)
        mask = (seq_range[None, :] < lengths[:, None]).astype(jnp.float32)[:, None, :]
    else:
        mask = jnp.transpose(mask.astype(jnp.float32), (0, 2, 1))

    tgt = jnp.transpose(target, (0, 2, 1)).astype(jnp.float32)       # (B, 1, T)

    # mask.sum() is a kernel-independent constant: compute it in plain JAX.
    msum = jnp.sum(mask)

    # Tile selection: large lane-dense time tiles; pad T with zeros if needed (the in-kernel
    # where(mask) guarantees padded columns contribute exactly 0).
    tile_t = min(int(tile_t), T)
    if tile_t < T:
        tile_t = max(128, (tile_t // 128) * 128)
    T_pad = -(-T // tile_t) * tile_t
    if T_pad != T:
        pad = T_pad - T
        y_hat = jnp.pad(y_hat, ((0, 0), (0, 0), (0, pad)))
        tgt = jnp.pad(tgt, ((0, 0), (0, 0), (0, pad)))
        mask = jnp.pad(mask, ((0, 0), (0, 0), (0, pad)))

    n_t = T_pad // tile_t
    P = num_parallel if (num_parallel > 0 and n_t % num_parallel == 0) else 1
    nt_pp = n_t // P

    # Zero-copy reshape so the [logits|means|log_scales] split is a leading-axis select in-kernel
    # (no sublane-offset slicing at nm / 2*nm). Keep the model's native dtype.
    yr = y_hat.reshape(B, 3, nm, T_pad)

    kernel = functools.partial(_dml_loss_kernel,
                               num_classes=num_classes, log_scale_min=float(log_scale_min))

    partials = pl.pallas_call(
        kernel,
        out_shape=jax.ShapeDtypeStruct((P, B, 1, tile_t), jnp.float32),
        grid_spec=pltpu.PrefetchScalarGridSpec(
            num_scalar_prefetch=0,
            grid=(P, nt_pp),
            in_specs=[
                pl.BlockSpec((B, 3, nm, tile_t), lambda p, t: (0, 0, 0, p * nt_pp + t)),
                pl.BlockSpec((B, 1, tile_t), lambda p, t: (0, 0, p * nt_pp + t)),
                pl.BlockSpec((B, 1, tile_t), lambda p, t: (0, 0, p * nt_pp + t)),
            ],
            out_specs=pl.BlockSpec((1, B, 1, tile_t), lambda p, t: (p, 0, 0, 0)),
        ),
        compiler_params=pltpu.CompilerParams(
            dimension_semantics=("parallel", "arbitrary")),
    )(yr, tgt, mask)

    # Final cross-lane/cross-slice reduction + divide happen once, outside the kernel.
    return jnp.sum(partials) / msum


def _reference_loss(y_hat, target, lengths, num_classes, log_scale_min):
    """Pure-JAX reference mirroring wavenet_vocoder.mixture.discretized_mix_logistic_loss."""
    B, C, T = y_hat.shape
    nm = C // 3
    yh = jnp.transpose(y_hat, (0, 2, 1))                   # (B, T, C)
    logit_probs = yh[:, :, :nm]
    means = yh[:, :, nm:2 * nm]
    log_scales = jnp.maximum(yh[:, :, 2 * nm:3 * nm], log_scale_min)
    y = jnp.broadcast_to(target, (B, T, nm))
    centered = y - means
    inv_stdv = jnp.exp(-log_scales)
    plus_in = inv_stdv * (centered + 1.0 / (num_classes - 1))
    min_in = inv_stdv * (centered - 1.0 / (num_classes - 1))
    cdf_plus = jax.nn.sigmoid(plus_in)
    cdf_min = jax.nn.sigmoid(min_in)
    log_cdf_plus = plus_in - jax.nn.softplus(plus_in)
    log_one_minus_cdf_min = -jax.nn.softplus(min_in)
    cdf_delta = cdf_plus - cdf_min
    mid_in = inv_stdv * centered
    log_pdf_mid = mid_in - log_scales - 2.0 * jax.nn.softplus(mid_in)
    inner_inner = jnp.where(cdf_delta > 1e-5,
                            jnp.log(jnp.maximum(cdf_delta, 1e-12)),
                            log_pdf_mid - np.log((num_classes - 1) / 2.0))
    inner = jnp.where(y > 0.999, log_one_minus_cdf_min, inner_inner)
    log_probs = jnp.where(y < -0.999, log_cdf_plus, inner)
    log_probs = log_probs + jax.nn.log_softmax(logit_probs, axis=-1)
    losses = -jax.scipy.special.logsumexp(log_probs, axis=-1)[..., None]   # (B, T, 1)
    seq_range = jnp.arange(T)
    mask = (seq_range[None, :] < lengths[:, None]).astype(jnp.float32)[..., None]
    return jnp.sum(losses * mask) / jnp.sum(mask)


if __name__ == "__main__":
    key = jax.random.PRNGKey(0)
    B, nr_mix, T = 2, 10, 2048         # input: (B, 3*nr_mix, T); target: (B, T, 1)
    k1, k2 = jax.random.split(key)

    y_hat = jax.random.normal(k1, (B, 3 * nr_mix, T), dtype=jnp.float32)
    target = jnp.clip(jax.random.normal(k2, (B, T, 1), dtype=jnp.float32) * 0.5, -1.0, 1.0)
    lengths = jnp.array([1500, 2048], dtype=jnp.int32)

    loss = discretized_mixture_logistic_loss(y_hat, target, lengths=lengths)
    loss = jax.block_until_ready(loss)

    ref = _reference_loss(y_hat, target, lengths,
                          HPARAMS["quantize_channels"], HPARAMS["log_scale_min"])
    np.testing.assert_allclose(np.asarray(loss), np.asarray(ref), rtol=1e-4, atol=1e-4)
    print("KERNEL_OK")
</pallas_src>

<mosaic_0001>
module attributes {stable_mosaic.version = 11 : i64} {
  func.func @_dml_loss_kernel(%arg0: i32, %arg1: i32, %arg2: memref<2x3x10x512xf32, #tpu.memory_space<vmem>>, %arg3: memref<2x1x512xf32, #tpu.memory_space<vmem>>, %arg4: memref<2x1x512xf32, #tpu.memory_space<vmem>>, %arg5: memref<1x2x1x512xf32, #tpu.memory_space<vmem>>) attributes {dimension_semantics = [#tpu.dimension_semantics<parallel>, #tpu.dimension_semantics<arbitrary>], iteration_bounds = array<i64: 2, 2>, scalar_prefetch = 0 : i64, scratch_operands = 0 : i64, tpu.core_type = #tpu.core_type<tc>, window_params = [{transform_indices = @transform_0, window_bounds = array<i64: 2, 3, 10, 512>}, {transform_indices = @transform_1, window_bounds = array<i64: 2, 1, 512>}, {transform_indices = @transform_2, window_bounds = array<i64: 2, 1, 512>}, {transform_indices = @transform_3, window_bounds = array<i64: 1, 2, 1, 512>}]} {
    %c0_i32 = arith.constant 0 : i32
    %0 = arith.cmpi eq, %arg1, %c0_i32 : i32
    %1 = arith.extui %0 : i1 to i32
    %c0_i32_0 = arith.constant 0 : i32
    %2 = arith.cmpi ne, %1, %c0_i32_0 : i32
    scf.if %2 {
      %cst_39 = arith.constant 0.000000e+00 : f32
      %123 = vector.broadcast %cst_39 : f32 to vector<1x2x1x512xf32>
      %c0_40 = arith.constant 0 : index
      %c0_41 = arith.constant 0 : index
      %c0_42 = arith.constant 0 : index
      %c0_43 = arith.constant 0 : index
      %124 = vector.load %arg5[%c0_40, %c0_41, %c0_42, %c0_43] : memref<1x2x1x512xf32, #tpu.memory_space<vmem>>, vector<1x2x1x512xf32>
      tpu.vector_store %arg5[%c0_40, %c0_41, %c0_42, %c0_43], %123 {strides = array<i32>} : memref<1x2x1x512xf32, #tpu.memory_space<vmem>>, vector<1x2x1x512xf32>,
    } else {
    }
    %c0 = arith.constant 0 : index
    %c0_1 = arith.constant 0 : index
    %c0_2 = arith.constant 0 : index
    %c0_3 = arith.constant 0 : index
    %3 = vector.load %arg2[%c0, %c0_1, %c0_2, %c0_3] : memref<2x3x10x512xf32, #tpu.memory_space<vmem>>, vector<2x3x10x512xf32>
    %4 = vector.extract_strided_slice %3 {offsets = [0, 0, 0, 0], sizes = [2, 1, 10, 512], strides = [1, 1, 1, 1]} : vector<2x3x10x512xf32> to vector<2x1x10x512xf32>
    %5 = vector.shape_cast %4 : vector<2x1x10x512xf32> to vector<2x10x512xf32>
    %6 = vector.extract_strided_slice %3 {offsets = [0, 1, 0, 0], sizes = [2, 1, 10, 512], strides = [1, 1, 1, 1]} : vector<2x3x10x512xf32> to vector<2x1x10x512xf32>
    %7 = vector.shape_cast %6 : vector<2x1x10x512xf32> to vector<2x10x512xf32>
    %8 = vector.extract_strided_slice %3 {offsets = [0, 2, 0, 0], sizes = [2, 1, 10, 512], strides = [1, 1, 1, 1]} : vector<2x3x10x512xf32> to vector<2x1x10x512xf32>
    %9 = vector.shape_cast %8 : vector<2x1x10x512xf32> to vector<2x10x512xf32>
    %cst = arith.constant -7.000000e+00 : f32
    %10 = vector.broadcast %cst : f32 to vector<2x10x512xf32>
    %11 = arith.maximumf %9, %10 : vector<2x10x512xf32>
    %c0_4 = arith.constant 0 : index
    %c0_5 = arith.constant 0 : index
    %c0_6 = arith.constant 0 : index
    %12 = vector.load %arg3[%c0_4, %c0_5, %c0_6] : memref<2x1x512xf32, #tpu.memory_space<vmem>>, vector<2x1x512xf32>
    %c0_7 = arith.constant 0 : index
    %c0_8 = arith.constant 0 : index
    %c0_9 = arith.constant 0 : index
    %13 = vector.load %arg4[%c0_7, %c0_8, %c0_9] : memref<2x1x512xf32, #tpu.memory_space<vmem>>, vector<2x1x512xf32>
    %cst_10 = arith.constant 0.000000e+00 : f32
    %14 = vector.broadcast %cst_10 : f32 to vector<2x10x512xf32>
    %15 = arith.subf %14, %11 : vector<2x10x512xf32>
    %16 = math.exp %15 : vector<2x10x512xf32>
    %17 = vector.broadcast %12 : vector<2x1x512xf32> to vector<2x10x512xf32>
    %18 = arith.subf %17, %7 : vector<2x10x512xf32>
    %19 = arith.mulf %16, %18 : vector<2x10x512xf32>
    %cst_11 = arith.constant 0.00392156886 : f32
    %20 = vector.broadcast %cst_11 : f32 to vector<2x10x512xf32>
    %21 = arith.mulf %16, %20 : vector<2x10x512xf32>
    %22 = arith.addf %19, %21 : vector<2x10x512xf32>
    %23 = arith.subf %19, %21 : vector<2x10x512xf32>
    %cst_12 = arith.constant 0.000000e+00 : f32
    %24 = vector.broadcast %cst_12 : f32 to vector<2x10x512xf32>
    %25 = arith.maximumf %22, %24 : vector<2x10x512xf32>
    %26 = vector.broadcast %cst_12 : f32 to vector<2x10x512xf32>
    %27 = arith.subf %22, %26 : vector<2x10x512xf32>
    %28 = arith.cmpf one, %27, %27 : vector<2x10x512xf32>
    %29 = vector.broadcast %cst_12 : f32 to vector<2x10x512xf32>
    %30 = arith.addf %22, %29 : vector<2x10x512xf32>
    %31 = math.absf %27 : vector<2x10x512xf32>
    %cst_13 = arith.constant 0.000000e+00 : f32
    %32 = vector.broadcast %cst_13 : f32 to vector<2x10x512xf32>
    %33 = arith.subf %32, %31 : vector<2x10x512xf32>
    %34 = math.exp %33 : vector<2x10x512xf32>
    %35 = math.log1p %34 : vector<2x10x512xf32>
    %36 = arith.addf %25, %35 : vector<2x10x512xf32>
    %37 = arith.select %28, %30, %36 : vector<2x10x512xi1>, vector<2x10x512xf32>
    %cst_14 = arith.constant 0.000000e+00 : f32
    %38 = vector.broadcast %cst_14 : f32 to vector<2x10x512xf32>
    %39 = arith.maximumf %23, %38 : vector<2x10x512xf32>
    %40 = vector.broadcast %cst_14 : f32 to vector<2x10x512xf32>
    %41 = arith.subf %23, %40 : vector<2x10x512xf32>
    %42 = arith.cmpf one, %41, %41 : vector<2x10x512xf32>
    %43 = vector.broadcast %cst_14 : f32 to vector<2x10x512xf32>
    %44 = arith.addf %23, %43 : vector<2x10x512xf32>
    %45 = math.absf %41 : vector<2x10x512xf32>
    %cst_15 = arith.constant 0.000000e+00 : f32
    %46 = vector.broadcast %cst_15 : f32 to vector<2x10x512xf32>
    %47 = arith.subf %46, %45 : vector<2x10x512xf32>
    %48 = math.exp %47 : vector<2x10x512xf32>
    %49 = math.log1p %48 : vector<2x10x512xf32>
    %50 = arith.addf %39, %49 : vector<2x10x512xf32>
    %51 = arith.select %42, %44, %50 : vector<2x10x512xi1>, vector<2x10x512xf32>
    %52 = arith.subf %22, %37 : vector<2x10x512xf32>
    %cst_16 = arith.constant 0.000000e+00 : f32
    %53 = vector.broadcast %cst_16 : f32 to vector<2x10x512xf32>
    %54 = arith.subf %53, %51 : vector<2x10x512xf32>
    %55 = math.exp %52 : vector<2x10x512xf32>
    %56 = arith.subf %23, %51 : vector<2x10x512xf32>
    %57 = math.exp %56 : vector<2x10x512xf32>
    %58 = arith.subf %55, %57 : vector<2x10x512xf32>
    %59 = arith.subf %19, %11 : vector<2x10x512xf32>
    %cst_17 = arith.constant 0.000000e+00 : f32
    %60 = vector.broadcast %cst_17 : f32 to vector<2x10x512xf32>
    %61 = arith.maximumf %19, %60 : vector<2x10x512xf32>
    %62 = vector.broadcast %cst_17 : f32 to vector<2x10x512xf32>
    %63 = arith.subf %19, %62 : vector<2x10x512xf32>
    %64 = arith.cmpf one, %63, %63 : vector<2x10x512xf32>
    %65 = vector.broadcast %cst_17 : f32 to vector<2x10x512xf32>
    %66 = arith.addf %19, %65 : vector<2x10x512xf32>
    %67 = math.absf %63 : vector<2x10x512xf32>
    %cst_18 = arith.constant 0.000000e+00 : f32
    %68 = vector.broadcast %cst_18 : f32 to vector<2x10x512xf32>
    %69 = arith.subf %68, %67 : vector<2x10x512xf32>
    %70 = math.exp %69 : vector<2x10x512xf32>
    %71 = math.log1p %70 : vector<2x10x512xf32>
    %72 = arith.addf %61, %71 : vector<2x10x512xf32>
    %73 = arith.select %64, %66, %72 : vector<2x10x512xi1>, vector<2x10x512xf32>
    %cst_19 = arith.constant 2.000000e+00 : f32
    %74 = vector.broadcast %cst_19 : f32 to vector<2x10x512xf32>
    %75 = arith.mulf %74, %73 : vector<2x10x512xf32>
    %76 = arith.subf %59, %75 : vector<2x10x512xf32>
    %cst_20 = arith.constant 9.99999974E-6 : f32
    %77 = vector.broadcast %cst_20 : f32 to vector<2x10x512xf32>
    %78 = arith.cmpf ogt, %58, %77 : vector<2x10x512xf32>
    %cst_21 = arith.constant 9.99999996E-13 : f32
    %79 = vector.broadcast %cst_21 : f32 to vector<2x10x512xf32>
    %80 = arith.maximumf %58, %79 : vector<2x10x512xf32>
    %81 = math.log %80 : vector<2x10x512xf32>
    %cst_22 = arith.constant 4.8481164 : f32
    %82 = vector.broadcast %cst_22 : f32 to vector<2x10x512xf32>
    %83 = arith.subf %76, %82 : vector<2x10x512xf32>
    %84 = arith.select %78, %81, %83 : vector<2x10x512xi1>, vector<2x10x512xf32>
    %cst_23 = arith.constant 9.990000e-01 : f32
    %85 = vector.broadcast %cst_23 : f32 to vector<2x1x512xf32>
    %86 = arith.cmpf ogt, %12, %85 : vector<2x1x512xf32>
    %87 = vector.shape_cast %86 : vector<2x1x512xi1> to vector<2x1x512xi1>
    %88 = vector.broadcast %87 : vector<2x1x512xi1> to vector<2x10x512xi1>
    %89 = arith.select %88, %54, %84 : vector<2x10x512xi1>, vector<2x10x512xf32>
    %cst_24 = arith.constant -9.990000e-01 : f32
    %90 = vector.broadcast %cst_24 : f32 to vector<2x1x512xf32>
    %91 = arith.cmpf olt, %12, %90 : vector<2x1x512xf32>
    %92 = vector.shape_cast %91 : vector<2x1x512xi1> to vector<2x1x512xi1>
    %93 = vector.broadcast %92 : vector<2x1x512xi1> to vector<2x10x512xi1>
    %94 = arith.select %93, %52, %89 : vector<2x10x512xi1>, vector<2x10x512xf32>
    %95 = arith.addf %94, %5 : vector<2x10x512xf32>
    %cst_25 = arith.constant dense<0xFF800000> : vector<2x512xf32>
    %96 = vector.multi_reduction <maximumf>, %95, %cst_25 [1] : vector<2x10x512xf32> to vector<2x512xf32>
    %97 = vector.shape_cast %96 : vector<2x512xf32> to vector<2x1x512xf32>
    %98 = vector.broadcast %97 : vector<2x1x512xf32> to vector<2x10x512xf32>
    %99 = arith.subf %95, %98 : vector<2x10x512xf32>
    %100 = math.exp %99 : vector<2x10x512xf32>
    %cst_26 = arith.constant dense<0.000000e+00> : vector<2x512xf32>
    %101 = vector.multi_reduction <add>, %100, %cst_26 [1] : vector<2x10x512xf32> to vector<2x512xf32>
    %102 = vector.shape_cast %101 : vector<2x512xf32> to vector<2x1x512xf32>
    %103 = math.log %102 : vector<2x1x512xf32>
    %104 = arith.addf %103, %97 : vector<2x1x512xf32>
    %cst_27 = arith.constant dense<0xFF800000> : vector<2x512xf32>
    %105 = vector.multi_reduction <maximumf>, %5, %cst_27 [1] : vector<2x10x512xf32> to vector<2x512xf32>
    %106 = vector.shape_cast %105 : vector<2x512xf32> to vector<2x1x512xf32>
    %107 = vector.broadcast %106 : vector<2x1x512xf32> to vector<2x10x512xf32>
    %108 = arith.subf %5, %107 : vector<2x10x512xf32>
    %109 = math.exp %108 : vector<2x10x512xf32>
    %cst_28 = arith.constant dense<0.000000e+00> : vector<2x512xf32>
    %110 = vector.multi_reduction <add>, %109, %cst_28 [1] : vector<2x10x512xf32> to vector<2x512xf32>
    %111 = vector.shape_cast %110 : vector<2x512xf32> to vector<2x1x512xf32>
    %112 = math.log %111 : vector<2x1x512xf32>
    %113 = arith.addf %112, %106 : vector<2x1x512xf32>
    %114 = arith.subf %113, %104 : vector<2x1x512xf32>
    %cst_29 = arith.constant 5.000000e-01 : f32
    %115 = vector.broadcast %cst_29 : f32 to vector<2x1x512xf32>
    %116 = arith.cmpf ogt, %13, %115 : vector<2x1x512xf32>
    %cst_30 = arith.constant 0.000000e+00 : f32
    %117 = vector.broadcast %cst_30 : f32 to vector<2x1x512xf32>
    %118 = arith.select %116, %114, %117 : vector<2x1x512xi1>, vector<2x1x512xf32>
    %c0_31 = arith.constant 0 : index
    %c0_32 = arith.constant 0 : index
    %c0_33 = arith.constant 0 : index
    %c0_34 = arith.constant 0 : index
    %119 = vector.load %arg5[%c0_31, %c0_32, %c0_33, %c0_34] : memref<1x2x1x512xf32, #tpu.memory_space<vmem>>, vector<1x2x1x512xf32>
    %120 = vector.shape_cast %118 : vector<2x1x512xf32> to vector<1x2x1x512xf32>
    %121 = arith.addf %119, %120 : vector<1x2x1x512xf32>
    %c0_35 = arith.constant 0 : index
    %c0_36 = arith.constant 0 : index
    %c0_37 = arith.constant 0 : index
    %c0_38 = arith.constant 0 : index
    %122 = vector.load %arg5[%c0_35, %c0_36, %c0_37, %c0_38] : memref<1x2x1x512xf32, #tpu.memory_space<vmem>>, vector<1x2x1x512xf32>
    tpu.vector_store %arg5[%c0_35, %c0_36, %c0_37, %c0_38], %121 {strides = array<i32>} : memref<1x2x1x512xf32, #tpu.memory_space<vmem>>, vector<1x2x1x512xf32>,
    return
  }
  func.func @transform_0(%arg0: i32, %arg1: i32) -> (i32, i32, i32, i32) {
    %c2_i32 = arith.constant 2 : i32
    %0 = arith.muli %arg0, %c2_i32 : i32
    %1 = arith.addi %0, %arg1 : i32
    %c0_i32 = arith.constant 0 : i32
    %c0_i32_0 = arith.constant 0 : i32
    %c0_i32_1 = arith.constant 0 : i32
    %c0_i32_2 = arith.constant 0 : i32
    return %c0_i32, %c0_i32_0, %c0_i32_1, %1 : i32, i32, i32, i32
  }
  func.func @transform_1(%arg0: i32, %arg1: i32) -> (i32, i32, i32) {
    %c2_i32 = arith.constant 2 : i32
    %0 = arith.muli %arg0, %c2_i32 : i32
    %1 = arith.addi %0, %arg1 : i32
    %c0_i32 = arith.constant 0 : i32
    %c0_i32_0 = arith.constant 0 : i32
    %c0_i32_1 = arith.constant 0 : i32
    return %c0_i32, %c0_i32_0, %1 : i32, i32, i32
  }
  func.func @transform_2(%arg0: i32, %arg1: i32) -> (i32, i32, i32) {
    %c2_i32 = arith.constant 2 : i32
    %0 = arith.muli %arg0, %c2_i32 : i32
    %1 = arith.addi %0, %arg1 : i32
    %c0_i32 = arith.constant 0 : i32
    %c0_i32_0 = arith.constant 0 : i32
    %c0_i32_1 = arith.constant 0 : i32
    return %c0_i32, %c0_i32_0, %1 : i32, i32, i32
  }
  func.func @transform_3(%arg0: i32, %arg1: i32) -> (i32, i32, i32, i32) {
    %c0_i32 = arith.constant 0 : i32
    %c0_i32_0 = arith.constant 0 : i32
    %c0_i32_1 = arith.constant 0 : i32
    %c0_i32_2 = arith.constant 0 : i32
    return %arg0, %c0_i32, %c0_i32_0, %c0_i32_1 : i32, i32, i32, i32
  }
}

</mosaic_0001>

<llo_original>
// kernel: tpu_custom_call.1
$region0: #{tpu_custom_call.1}
  #allocation0 [shape = 'u32[]', space=smem, size = 0x4, offset = 0x4, fixed_abs, tag = 'smem constant byte address 0x4 - core index']
  #allocation1 [shape = 'u32[72,128]{1,0:T(1,128)}', space=vmem, size = 0x9000, scoped, tag = 'internal scratch']
  %s0 = inlined_call_operand.vmem [shape: f32[2,3,10,2048], index: 0, kind: input, shape index: {}]
  %s1 = inlined_call_operand.vmem [shape: f32[2,1,2048], index: 1, kind: input, shape index: {}]
  %s2 = inlined_call_operand.vmem [shape: f32[2,1,2048], index: 2, kind: input, shape index: {}]
  %s3 = inlined_call_operand.hbm [shape: f32[2,2,1,512], index: 3, kind: output, shape index: {}]
  %s4 = sld [smem:[#allocation0]]
  $region154: #{tpu_custom_call.1} parent=0
    _
  %s6 = ssub.s32 1, %s4
  %s7 = scalar_select 0, %s6, %s4
  $region1: #{tpu_custom_call.1} parent=0
    #allocation2 [shape = 'u8[393216]{0}', space=vmem, size = 0x60000, scoped, tag = 'input window, operand 0']
    #allocation3 [shape = 'u8[8192]{0}', space=vmem, size = 0x2000, scoped, tag = 'input window, operand 1']
    #allocation4 [shape = 'u8[8192]{0}', space=vmem, size = 0x2000, scoped, tag = 'input window, operand 2']
    #allocation5 [shape = 'u8[8192]{0}', space=vmem, size = 0x2000, scoped, tag = 'output window, operand 0']
    #allocation6 [shape = 's32[2]{0}', space=sflag, size = 0x8, scoped, tag = 'scoped memory for tpu_custom_call.1']
    %8 = vsyncpa [#allocation6], 0
    %s9 = scalar_lea.sflag [#allocation6], 1
    %10 = vsyncpa %s9, 0
    loop: start=0, step=1, limit=6
    $region2: #{tpu_custom_call.1} parent=1 // loop_pre_header
      _
    $region3: #{tpu_custom_call.1} parent=1 // loop_header
      %s12 = sphi 0, %s16
      %p13 = scmp.ge.s32.totalorder %s12, 6
      %s19 = sphi 0, %s31
      %s20 = sphi 0, %s27
      %s21 = sphi 0, %s19
      %s22 = sphi 0, %s20
      %s23 = sphi 0, %s21
      %s24 = sphi 0, %s22
      %s38 = sphi 0, %s40
      %s41 = sphi 0, %s38
      %s42 = sphi 0, %s41
      %s58 = sphi 0, %s42
      %s68 = sphi 0, %s70
      %s71 = sphi 0, %s68
      %s72 = sphi 0, %s71
      %s88 = sphi 0, %s72
      %s98 = sphi 0, %s100
      %s101 = sphi 0, %s98
      %s102 = sphi 0, %s101
      %s118 = sphi 0, %s102
      %s124 = sphi 0, %s126
      %s127 = sphi 0, %s124
      %s128 = sphi 0, %s127
      %s144 = sphi 0, %s128
    $region4: #{tpu_custom_call.1} parent=1 // loop_header_branch
      %15 = sbr.rel (%p13) target = $region8
    $region5: #{tpu_custom_call.1} parent=1 // loop_body
      %s17 = ssub.s32 %s12, 1
      %s18 = ssub.s32 %s12, 2
      %s25 = sadd.s32 1, %s20
      %p26 = scmp.ge.s32.totalorder %s25, 2
      %s27 = scalar_select %p26, 0, %s25
      %s28 = sadd.s32 1, %s19
      %s29 = scalar_select %p26, %s28, %s19
      %p30 = scmp.ge.s32.totalorder %s29, 2
      %s31 = scalar_select %p30, 0, %s29
      %s32 = smul.u32 %s19, 2
      %s33 = sadd.s32 %s32, %s20
      %s34 = smul.u32 %s31, 2
      %s35 = sadd.s32 %s34, %s27
      %s36 = ssub.s32 %s33, %s35
      %p37 = scmp.eq.s32.totalorder %s36, 0
      %s39 = sadd.s32 %s38, 1
      %s40 = scalar_select %p37, %s38, %s39
      %p43 = pneg %p37
      %p44 = scmp.eq.s32.totalorder %s12, 3
      %p45 = por %p43, %p44
      %p46 = scmp.ne.s32.totalorder %s38, %s41
      %p47 = scmp.eq.s32.totalorder %s12, 0
      %p48 = por %p46, %p47
      %p49 = scmp.ne.s32.totalorder %s38, %s41
      %p50 = scmp.eq.s32.totalorder %s17, 3
      %p51 = por %p49, %p50
      %p52 = scmp.ne.s32.totalorder %s41, %s42
      %p53 = scmp.eq.s32.totalorder %s17, 0
      %p54 = por %p52, %p53
      %p55 = scmp.ne.s32.totalorder %s41, %s42
      %p56 = scmp.eq.s32.totalorder %s18, 3
      %p57 = por %p55, %p56
      %p59 = scmp.ne.s32.totalorder %s42, %s58
      %p60 = scmp.eq.s32.totalorder %s18, 0
      %p61 = por %p59, %p60
      %s62 = smul.u32 %s19, 2
      %s63 = sadd.s32 %s62, %s20
      %s64 = smul.u32 %s31, 2
      %s65 = sadd.s32 %s64, %s27
      %s66 = ssub.s32 %s63, %s65
      %p67 = scmp.eq.s32.totalorder %s66, 0
      %s69 = sadd.s32 %s68, 1
      %s70 = scalar_select %p67, %s68, %s69
      %p73 = pneg %p67
      %p74 = scmp.eq.s32.totalorder %s12, 3
      %p75 = por %p73, %p74
      %p76 = scmp.ne.s32.totalorder %s68, %s71
      %p77 = scmp.eq.s32.totalorder %s12, 0
      %p78 = por %p76, %p77
      %p79 = scmp.ne.s32.totalorder %s68, %s71
      %p80 = scmp.eq.s32.totalorder %s17, 3
      %p81 = por %p79, %p80
      %p82 = scmp.ne.s32.totalorder %s71, %s72
      %p83 = scmp.eq.s32.totalorder %s17, 0
      %p84 = por %p82, %p83
      %p85 = scmp.ne.s32.totalorder %s71, %s72
      %p86 = scmp.eq.s32.totalorder %s18, 3
      %p87 = por %p85, %p86
      %p89 = scmp.ne.s32.totalorder %s72, %s88
      %p90 = scmp.eq.s32.totalorder %s18, 0
      %p91 = por %p89, %p90
      %s92 = smul.u32 %s19, 2
      %s93 = sadd.s32 %s92, %s20
      %s94 = smul.u32 %s31, 2
      %s95 = sadd.s32 %s94, %s27
      %s96 = ssub.s32 %s93, %s95
      %p97 = scmp.eq.s32.totalorder %s96, 0
      %s99 = sadd.s32 %s98, 1
      %s100 = scalar_select %p97, %s98, %s99
      %p103 = pneg %p97
      %p104 = scmp.eq.s32.totalorder %s12, 3
      %p105 = por %p103, %p104
      %p106 = scmp.ne.s32.totalorder %s98, %s101
      %p107 = scmp.eq.s32.totalorder %s12, 0
      %p108 = por %p106, %p107
      %p109 = scmp.ne.s32.totalorder %s98, %s101
      %p110 = scmp.eq.s32.totalorder %s17, 3
      %p111 = por %p109, %p110
      %p112 = scmp.ne.s32.totalorder %s101, %s102
      %p113 = scmp.eq.s32.totalorder %s17, 0
      %p114 = por %p112, %p113
      %p115 = scmp.ne.s32.totalorder %s101, %s102
      %p116 = scmp.eq.s32.totalorder %s18, 3
      %p117 = por %p115, %p116
      %p119 = scmp.ne.s32.totalorder %s102, %s118
      %p120 = scmp.eq.s32.totalorder %s18, 0
      %p121 = por %p119, %p120
      %s122 = ssub.s32 %s19, %s31
      %p123 = scmp.eq.s32.totalorder %s122, 0
      %s125 = sadd.s32 %s124, 1
      %s126 = scalar_select %p123, %s124, %s125
      %p129 = pneg %p123
      %p130 = scmp.eq.s32.totalorder %s12, 3
      %p131 = por %p129, %p130
      %p132 = scmp.ne.s32.totalorder %s124, %s127
      %p133 = scmp.eq.s32.totalorder %s12, 0
      %p134 = por %p132, %p133
      %p135 = scmp.ne.s32.totalorder %s124, %s127
      %p136 = scmp.eq.s32.totalorder %s17, 3
      %p137 = por %p135, %p136
      %p138 = scmp.ne.s32.totalorder %s127, %s128
      %p139 = scmp.eq.s32.totalorder %s17, 0
      %p140 = por %p138, %p139
      %p141 = scmp.ne.s32.totalorder %s127, %s128
      %p142 = scmp.eq.s32.totalorder %s18, 3
      %p143 = por %p141, %p142
      %p145 = scmp.ne.s32.totalorder %s128, %s144
      %p146 = scmp.eq.s32.totalorder %s18, 0
      %p147 = por %p145, %p146
      %p148 = scmp.le.s32.totalorder 1, %s12
      %p149 = scmp.lt.s32.totalorder %s12, 5
      %p150 = pnand %p148, %p149
      %p151 = pneg %p150
      // Predicated region
      $region9: #{tpu_custom_call.1} parent=5 // pred_check
        _
      $region10: #{tpu_custom_call.1} parent=5 // pred_check_branch
        %153 = sbr.rel (%p150) target = $region12
      $region11: #{tpu_custom_call.1} parent=5 // pred_region
        %s154 = ssub.s32 %s12, 1
      $region12: #{tpu_custom_call.1} parent=5 // pred_fallthru
        _
      %p155 = scmp.lt.s32.totalorder %s12, 4
      // Predicated region
      $region13: #{tpu_custom_call.1} parent=5 // pred_check
        %p156 = pneg %p155
      $region14: #{tpu_custom_call.1} parent=5 // pred_check_branch
        %158 = sbr.rel (%p156) target = $region16
      $region15: #{tpu_custom_call.1} parent=5 // pred_region
        // Predicated region
        $region17: #{tpu_custom_call.1} parent=15 // pred_check
          %p159 = pneg %p48
        $region18: #{tpu_custom_call.1} parent=15 // pred_check_branch
          %161 = sbr.rel (%p159) target = $region20
        $region19: #{tpu_custom_call.1} parent=15 // pred_region
          %s162 = sand.u32 %s38, 1
          %s163 = sand.u32 %s38, 1
          %s164 = smul.addr %s163, 384
          %s165 = scalar_lea.vmem [#allocation2], %s164
          %s166 = smul.u32 %s19, 2
          %s167 = sadd.s32 %s166, %s20
          %s168 = smul.u32 4, %s167
          %s169 = smul.addr %s168, 8
          %s170 = scalar_lea.vmem %s0, %s169
          // Predicated region
          $region21: #{tpu_custom_call.1} parent=19 // pred_check
            _
          $region22: #{tpu_custom_call.1} parent=19 // pred_check_branch
            %172 = sbr.rel (0) target = $region24
          $region23: #{tpu_custom_call.1} parent=19 // pred_region
            // Predicated region
            $region25: #{tpu_custom_call.1} parent=23 // pred_check
              _
            $region26: #{tpu_custom_call.1} parent=23 // pred_check_branch
              %174 = sbr.rel (0) target = $region28
            $region27: #{tpu_custom_call.1} parent=23 // pred_region
              loop: start=0, step=1, limit=1
              $region29: #{tpu_custom_call.1} parent=27 // loop_pre_header
                _
              $region30: #{tpu_custom_call.1} parent=27 // loop_header
                %s176 = sphi 0, %s180
                %p177 = scmp.ge.s32.totalorder %s176, 1
                %s181 = sphi %s170, %s170
                %s182 = sphi %s165, %s165
              $region31: #{tpu_custom_call.1} parent=27 // loop_header_branch
                %179 = sbr.rel (%p177) target = $region35
              $region32: #{tpu_custom_call.1} parent=27 // loop_body
                %v183 = vld [vmem:[%s181] sm:$0xff]
                %184 = vst [vmem:[%s182] sm:$0xff] %v183
                %v185 = vld [vmem:[%s181 + $0x8] sm:$0xff]
                %186 = vst [vmem:[%s182 + $0x8] sm:$0xff] %v185
                %v187 = vld [vmem:[%s181 + $0x10] sm:$0xff]
                %188 = vst [vmem:[%s182 + $0x10] sm:$0xff] %v187
                %v189 = vld [vmem:[%s181 + $0x18] sm:$0xff]
                %190 = vst [vmem:[%s182 + $0x18] sm:$0xff] %v189
                %v191 = vld [vmem:[%s181 + $0x80] sm:$0xff]
                %192 = vst [vmem:[%s182 + $0x20] sm:$0xff] %v191
                %v193 = vld [vmem:[%s181 + $0x88] sm:$0xff]
                %194 = vst [vmem:[%s182 + $0x28] sm:$0xff] %v193
                %v195 = vld [vmem:[%s181 + $0x90] sm:$0xff]
                %196 = vst [vmem:[%s182 + $0x30] sm:$0xff] %v195
                %v197 = vld [vmem:[%s181 + $0x98] sm:$0xff]
                %198 = vst [vmem:[%s182 + $0x38] sm:$0xff] %v197
                %v199 = vld [vmem:[%s181 + $0x100] sm:$0xff]
                %200 = vst [vmem:[%s182 + $0x40] sm:$0xff] %v199
                %v201 = vld [vmem:[%s181 + $0x108] sm:$0xff]
                %202 = vst [vmem:[%s182 + $0x48] sm:$0xff] %v201
                %v203 = vld [vmem:[%s181 + $0x110] sm:$0xff]
                %204 = vst [vmem:[%s182 + $0x50] sm:$0xff] %v203
                %v205 = vld [vmem:[%s181 + $0x118] sm:$0xff]
                %206 = vst [vmem:[%s182 + $0x58] sm:$0xff] %v205
                %v207 = vld [vmem:[%s181 + $0x180] sm:$0xff]
                %208 = vst [vmem:[%s182 + $0x60] sm:$0xff] %v207
                %v209 = vld [vmem:[%s181 + $0x188] sm:$0xff]
                %210 = vst [vmem:[%s182 + $0x68] sm:$0xff] %v209
                %v211 = vld [vmem:[%s181 + $0x190] sm:$0xff]
                %212 = vst [vmem:[%s182 + $0x70] sm:$0xff] %v211
                %v213 = vld [vmem:[%s181 + $0x198] sm:$0xff]
                %214 = vst [vmem:[%s182 + $0x78] sm:$0xff] %v213
                %v215 = vld [vmem:[%s181 + $0x200] sm:$0xff]
                %216 = vst [vmem:[%s182 + $0x80] sm:$0xff] %v215
                %v217 = vld [vmem:[%s181 + $0x208] sm:$0xff]
                %218 = vst [vmem:[%s182 + $0x88] sm:$0xff] %v217
                %v219 = vld [vmem:[%s181 + $0x210] sm:$0xff]
                %220 = vst [vmem:[%s182 + $0x90] sm:$0xff] %v219
                %v221 = vld [vmem:[%s181 + $0x218] sm:$0xff]
                %222 = vst [vmem:[%s182 + $0x98] sm:$0xff] %v221
                %v223 = vld [vmem:[%s181 + $0x280] sm:$0xff]
                %224 = vst [vmem:[%s182 + $0xa0] sm:$0xff] %v223
                %v225 = vld [vmem:[%s181 + $0x288] sm:$0xff]
                %226 = vst [vmem:[%s182 + $0xa8] sm:$0xff] %v225
                %v227 = vld [vmem:[%s181 + $0x290] sm:$0xff]
                %228 = vst [vmem:[%s182 + $0xb0] sm:$0xff] %v227
                %v229 = vld [vmem:[%s181 + $0x298] sm:$0xff]
                %230 = vst [vmem:[%s182 + $0xb8] sm:$0xff] %v229
                %v231 = vld [vmem:[%s181 + $0x300] sm:$0xff]
                %232 = vst [vmem:[%s182 + $0xc0] sm:$0xff] %v231
                %v233 = vld [vmem:[%s181 + $0x308] sm:$0xff]
                %234 = vst [vmem:[%s182 + $0xc8] sm:$0xff] %v233
                %v235 = vld [vmem:[%s181 + $0x310] sm:$0xff]
                %236 = vst [vmem:[%s182 + $0xd0] sm:$0xff] %v235
                %v237 = vld [vmem:[%s181 + $0x318] sm:$0xff]
                %238 = vst [vmem:[%s182 + $0xd8] sm:$0xff] %v237
                %v239 = vld [vmem:[%s181 + $0x380] sm:$0xff]
                %240 = vst [vmem:[%s182 + $0xe0] sm:$0xff] %v239
                %v241 = vld [vmem:[%s181 + $0x388] sm:$0xff]
                %242 = vst [vmem:[%s182 + $0xe8] sm:$0xff] %v241
                %v243 = vld [vmem:[%s181 + $0x390] sm:$0xff]
                %244 = vst [vmem:[%s182 + $0xf0] sm:$0xff] %v243
                %v245 = vld [vmem:[%s181 + $0x398] sm:$0xff]
                %246 = vst [vmem:[%s182 + $0xf8] sm:$0xff] %v245
                %v247 = vld [vmem:[%s181 + $0x400] sm:$0xff]
                %248 = vst [vmem:[%s182 + $0x100] sm:$0xff] %v247
                %v249 = vld [vmem:[%s181 + $0x408] sm:$0xff]
                %250 = vst [vmem:[%s182 + $0x108] sm:$0xff] %v249
                %v251 = vld [vmem:[%s181 + $0x410] sm:$0xff]
                %252 = vst [vmem:[%s182 + $0x110] sm:$0xff] %v251
                %v253 = vld [vmem:[%s181 + $0x418] sm:$0xff]
                %254 = vst [vmem:[%s182 + $0x118] sm:$0xff] %v253
                %v255 = vld [vmem:[%s181 + $0x480] sm:$0xff]
                %256 = vst [vmem:[%s182 + $0x120] sm:$0xff] %v255
                %v257 = vld [vmem:[%s181 + $0x488] sm:$0xff]
                %258 = vst [vmem:[%s182 + $0x128] sm:$0xff] %v257
                %v259 = vld [vmem:[%s181 + $0x490] sm:$0xff]
                %260 = vst [vmem:[%s182 + $0x130] sm:$0xff] %v259
                %v261 = vld [vmem:[%s181 + $0x498] sm:$0xff]
                %262 = vst [vmem:[%s182 + $0x138] sm:$0xff] %v261
                %v263 = vld [vmem:[%s181 + $0x500] sm:$0xff]
                %264 = vst [vmem:[%s182 + $0x140] sm:$0xff] %v263
                %v265 = vld [vmem:[%s181 + $0x508] sm:$0xff]
                %266 = vst [vmem:[%s182 + $0x148] sm:$0xff] %v265
                %v267 = vld [vmem:[%s181 + $0x510] sm:$0xff]
                %268 = vst [vmem:[%s182 + $0x150] sm:$0xff] %v267
                %v269 = vld [vmem:[%s181 + $0x518] sm:$0xff]
                %270 = vst [vmem:[%s182 + $0x158] sm:$0xff] %v269
                %v271 = vld [vmem:[%s181 + $0x580] sm:$0xff]
                %272 = vst [vmem:[%s182 + $0x160] sm:$0xff] %v271
                %v273 = vld [vmem:[%s181 + $0x588] sm:$0xff]
                %274 = vst [vmem:[%s182 + $0x168] sm:$0xff] %v273
                %v275 = vld [vmem:[%s181 + $0x590] sm:$0xff]
                %276 = vst [vmem:[%s182 + $0x170] sm:$0xff] %v275
                %v277 = vld [vmem:[%s181 + $0x598] sm:$0xff]
                %278 = vst [vmem:[%s182 + $0x178] sm:$0xff] %v277
              $region33: #{tpu_custom_call.1} parent=27 // loop_footer
                %s180 = sadd.s32 1, %s176
              $region34: #{tpu_custom_call.1} parent=27 // loop_footer_branch
                %175 = sbr.rel target = $region30
              $region35: #{tpu_custom_call.1} parent=27 // loop_exit
                _
            $region28: #{tpu_custom_call.1} parent=23 // pred_fallthru
              _
            // Predicated region
            $region36: #{tpu_custom_call.1} parent=23 // pred_check
              _
            $region37: #{tpu_custom_call.1} parent=23 // pred_check_branch
              %280 = sbr.rel target = $region39
            $region38: #{tpu_custom_call.1} parent=23 // pred_region
              _
            $region39: #{tpu_custom_call.1} parent=23 // pred_fallthru
              _
          $region24: #{tpu_custom_call.1} parent=19 // pred_fallthru
            _
          %281 = vnop
        $region20: #{tpu_custom_call.1} parent=15 // pred_fallthru
          _
        // Predicated region
        $region40: #{tpu_custom_call.1} parent=15 // pred_check
          %p282 = pneg %p78
        $region41: #{tpu_custom_call.1} parent=15 // pred_check_branch
          %284 = sbr.rel (%p282) target = $region43
        $region42: #{tpu_custom_call.1} parent=15 // pred_region
          %s285 = sand.u32 %s68, 1
          %s286 = sand.u32 %s68, 1
          %s287 = smul.addr %s286, 8
          %s288 = scalar_lea.vmem [#allocation3], %s287
          %s289 = smul.u32 %s19, 2
          %s290 = sadd.s32 %s289, %s20
          %s291 = smul.u32 4, %s290
          %s292 = scalar_lea.vmem %s1, %s291
          // Predicated region
          $region44: #{tpu_custom_call.1} parent=42 // pred_check
            _
          $region45: #{tpu_custom_call.1} parent=42 // pred_check_branch
            %294 = sbr.rel (0) target = $region47
          $region46: #{tpu_custom_call.1} parent=42 // pred_region
            // Predicated region
            $region48: #{tpu_custom_call.1} parent=46 // pred_check
              _
            $region49: #{tpu_custom_call.1} parent=46 // pred_check_branch
              %296 = sbr.rel target = $region51
            $region50: #{tpu_custom_call.1} parent=46 // pred_region
              // Predicated region
              $region63: #{tpu_custom_call.1} parent=50 // pred_check
                _
              $region64: #{tpu_custom_call.1} parent=50 // pred_check_branch
                %314 = sbr.rel (0) target = $region66
              $region65: #{tpu_custom_call.1} parent=50 // pred_region
                loop: start=0, step=1, limit=1
                $region67: #{tpu_custom_call.1} parent=65 // loop_pre_header
                  _
                $region68: #{tpu_custom_call.1} parent=65 // loop_header
                  %s316 = sphi 0, %s320
                  %p317 = scmp.ge.s32.totalorder %s316, 1
                  %s321 = sphi %s292, %s292
                  %s322 = sphi %s288, %s288
                $region69: #{tpu_custom_call.1} parent=65 // loop_header_branch
                  %319 = sbr.rel (%p317) target = $region73
                $region70: #{tpu_custom_call.1} parent=65 // loop_body
                  _
                $region71: #{tpu_custom_call.1} parent=65 // loop_footer
                  %s320 = sadd.s32 1, %s316
                $region72: #{tpu_custom_call.1} parent=65 // loop_footer_branch
                  %315 = sbr.rel target = $region68
                $region73: #{tpu_custom_call.1} parent=65 // loop_exit
                  _
                %s324 = ssub.s32 16, 1
                loop: start=0, step=1, limit=1
                $region74: #{tpu_custom_call.1} parent=65 // loop_pre_header
                  _
                $region75: #{tpu_custom_call.1} parent=65 // loop_header
                  %s326 = sphi 0, %s330
                  %p327 = scmp.ge.s32.totalorder %s326, 1
                  %s331 = sphi %s292, %s292
                  %s332 = sphi %s288, %s288
                $region76: #{tpu_custom_call.1} parent=65 // loop_header_branch
                  %329 = sbr.rel (%p327) target = $region80
                $region77: #{tpu_custom_call.1} parent=65 // loop_body
                  %v333 = vld [vmem:[%s331] sm:%s324]
                  %334 = vst [vmem:[%s332] sm:%s324] %v333
                  %v335 = vld [vmem:[%s331 + $0x10] sm:%s324]
                  %336 = vst [vmem:[%s332 + $0x4] sm:%s324] %v335
                $region78: #{tpu_custom_call.1} parent=65 // loop_footer
                  %s330 = sadd.s32 1, %s326
                $region79: #{tpu_custom_call.1} parent=65 // loop_footer_branch
                  %325 = sbr.rel target = $region75
                $region80: #{tpu_custom_call.1} parent=65 // loop_exit
                  _
              $region66: #{tpu_custom_call.1} parent=50 // pred_fallthru
                _
            $region51: #{tpu_custom_call.1} parent=46 // pred_fallthru
              _
            // Predicated region
            $region52: #{tpu_custom_call.1} parent=46 // pred_check
              _
            $region53: #{tpu_custom_call.1} parent=46 // pred_check_branch
              %298 = sbr.rel (0) target = $region55
            $region54: #{tpu_custom_call.1} parent=46 // pred_region
              %s300 = ssub.s32 16, 1
              loop: start=0, step=1, limit=1
              $region56: #{tpu_custom_call.1} parent=54 // loop_pre_header
                _
              $region57: #{tpu_custom_call.1} parent=54 // loop_header
                %s302 = sphi 0, %s306
                %p303 = scmp.ge.s32.totalorder %s302, 1
                %s307 = sphi %s292, %s292
                %s308 = sphi %s288, %s288
              $region58: #{tpu_custom_call.1} parent=54 // loop_header_branch
                %305 = sbr.rel (%p303) target = $region62
              $region59: #{tpu_custom_call.1} parent=54 // loop_body
                %v309 = vld [vmem:[%s307] sm:%s300]
                %310 = vst [vmem:[%s308] sm:%s300] %v309
                %v311 = vld [vmem:[%s307 + $0x10] sm:%s300]
                %312 = vst [vmem:[%s308 + $0x4] sm:%s300] %v311
              $region60: #{tpu_custom_call.1} parent=54 // loop_footer
                %s306 = sadd.s32 1, %s302
              $region61: #{tpu_custom_call.1} parent=54 // loop_footer_branch
                %301 = sbr.rel target = $region57
              $region62: #{tpu_custom_call.1} parent=54 // loop_exit
                _
            $region55: #{tpu_custom_call.1} parent=46 // pred_fallthru
              _
          $region47: #{tpu_custom_call.1} parent=42 // pred_fallthru
            _
          %337 = vnop
        $region43: #{tpu_custom_call.1} parent=15 // pred_fallthru
          _
        // Predicated region
        $region81: #{tpu_custom_call.1} parent=15 // pred_check
          %p338 = pneg %p108
        $region82: #{tpu_custom_call.1} parent=15 // pred_check_branch
          %340 = sbr.rel (%p338) target = $region84
        $region83: #{tpu_custom_call.1} parent=15 // pred_region
          %s341 = sand.u32 %s98, 1
          %s342 = sand.u32 %s98, 1
          %s343 = smul.addr %s342, 8
          %s344 = scalar_lea.vmem [#allocation4], %s343
          %s345 = smul.u32 %s19, 2
          %s346 = sadd.s32 %s345, %s20
          %s347 = smul.u32 4, %s346
          %s348 = scalar_lea.vmem %s2, %s347
          // Predicated region
          $region85: #{tpu_custom_call.1} parent=83 // pred_check
            _
          $region86: #{tpu_custom_call.1} parent=83 // pred_check_branch
            %350 = sbr.rel (0) target = $region88
          $region87: #{tpu_custom_call.1} parent=83 // pred_region
            // Predicated region
            $region89: #{tpu_custom_call.1} parent=87 // pred_check
              _
            $region90: #{tpu_custom_call.1} parent=87 // pred_check_branch
              %352 = sbr.rel target = $region92
            $region91: #{tpu_custom_call.1} parent=87 // pred_region
              // Predicated region
              $region104: #{tpu_custom_call.1} parent=91 // pred_check
                _
              $region105: #{tpu_custom_call.1} parent=91 // pred_check_branch
                %370 = sbr.rel (0) target = $region107
              $region106: #{tpu_custom_call.1} parent=91 // pred_region
                loop: start=0, step=1, limit=1
                $region108: #{tpu_custom_call.1} parent=106 // loop_pre_header
                  _
                $region109: #{tpu_custom_call.1} parent=106 // loop_header
                  %s372 = sphi 0, %s376
                  %p373 = scmp.ge.s32.totalorder %s372, 1
                  %s377 = sphi %s348, %s348
                  %s378 = sphi %s344, %s344
                $region110: #{tpu_custom_call.1} parent=106 // loop_header_branch
                  %375 = sbr.rel (%p373) target = $region114
                $region111: #{tpu_custom_call.1} parent=106 // loop_body
                  _
                $region112: #{tpu_custom_call.1} parent=106 // loop_footer
                  %s376 = sadd.s32 1, %s372
                $region113: #{tpu_custom_call.1} parent=106 // loop_footer_branch
                  %371 = sbr.rel target = $region109
                $region114: #{tpu_custom_call.1} parent=106 // loop_exit
                  _
                %s380 = ssub.s32 16, 1
                loop: start=0, step=1, limit=1
                $region115: #{tpu_custom_call.1} parent=106 // loop_pre_header
                  _
                $region116: #{tpu_custom_call.1} parent=106 // loop_header
                  %s382 = sphi 0, %s386
                  %p383 = scmp.ge.s32.totalorder %s382, 1
                  %s387 = sphi %s348, %s348
                  %s388 = sphi %s344, %s344
                $region117: #{tpu_custom_call.1} parent=106 // loop_header_branch
                  %385 = sbr.rel (%p383) target = $region121
                $region118: #{tpu_custom_call.1} parent=106 // loop_body
                  %v389 = vld [vmem:[%s387] sm:%s380]
                  %390 = vst [vmem:[%s388] sm:%s380] %v389
                  %v391 = vld [vmem:[%s387 + $0x10] sm:%s380]
                  %392 = vst [vmem:[%s388 + $0x4] sm:%s380] %v391
                $region119: #{tpu_custom_call.1} parent=106 // loop_footer
                  %s386 = sadd.s32 1, %s382
                $region120: #{tpu_custom_call.1} parent=106 // loop_footer_branch
                  %381 = sbr.rel target = $region116
                $region121: #{tpu_custom_call.1} parent=106 // loop_exit
                  _
              $region107: #{tpu_custom_call.1} parent=91 // pred_fallthru
                _
            $region92: #{tpu_custom_call.1} parent=87 // pred_fallthru
              _
            // Predicated region
            $region93: #{tpu_custom_call.1} parent=87 // pred_check
              _
            $region94: #{tpu_custom_call.1} parent=87 // pred_check_branch
              %354 = sbr.rel (0) target = $region96
            $region95: #{tpu_custom_call.1} parent=87 // pred_region
              %s356 = ssub.s32 16, 1
              loop: start=0, step=1, limit=1
              $region97: #{tpu_custom_call.1} parent=95 // loop_pre_header
                _
              $region98: #{tpu_custom_call.1} parent=95 // loop_header
                %s358 = sphi 0, %s362
                %p359 = scmp.ge.s32.totalorder %s358, 1
                %s363 = sphi %s348, %s348
                %s364 = sphi %s344, %s344
              $region99: #{tpu_custom_call.1} parent=95 // loop_header_branch
                %361 = sbr.rel (%p359) target = $region103
              $region100: #{tpu_custom_call.1} parent=95 // loop_body
                %v365 = vld [vmem:[%s363] sm:%s356]
                %366 = vst [vmem:[%s364] sm:%s356] %v365
                %v367 = vld [vmem:[%s363 + $0x10] sm:%s356]
                %368 = vst [vmem:[%s364 + $0x4] sm:%s356] %v367
              $region101: #{tpu_custom_call.1} parent=95 // loop_footer
                %s362 = sadd.s32 1, %s358
              $region102: #{tpu_custom_call.1} parent=95 // loop_footer_branch
                %357 = sbr.rel target = $region98
              $region103: #{tpu_custom_call.1} parent=95 // loop_exit
                _
            $region96: #{tpu_custom_call.1} parent=87 // pred_fallthru
              _
          $region88: #{tpu_custom_call.1} parent=83 // pred_fallthru
            _
          %393 = vnop
        $region84: #{tpu_custom_call.1} parent=15 // pred_fallthru
          _
      $region16: #{tpu_custom_call.1} parent=5 // pred_fallthru
        _
      %p394 = scmp.le.s32.totalorder 1, %s12
      %p395 = scmp.lt.s32.totalorder %s12, 5
      %p396 = pnand %p394, %p395
      %p397 = pneg %p396
      // Predicated region
      $region122: #{tpu_custom_call.1} parent=5 // pred_check
        _
      $region123: #{tpu_custom_call.1} parent=5 // pred_check_branch
        %399 = sbr.rel (%p396) target = $region125
      $region124: #{tpu_custom_call.1} parent=5 // pred_region
        %s400 = ssub.s32 %s12, 1
        %s401 = sand.u32 %s41, 1
        %s402 = sand.u32 %s41, 1
        %s403 = smul.addr %s402, 384
        %s404 = scalar_lea.vmem [#allocation2], %s403
        // Predicated region
        $region126: #{tpu_custom_call.1} parent=124 // pred_check
          %p405 = pneg %p54
        $region127: #{tpu_custom_call.1} parent=124 // pred_check_branch
          %407 = sbr.rel (%p405) target = $region129
        $region128: #{tpu_custom_call.1} parent=124 // pred_region
          _
        $region129: #{tpu_custom_call.1} parent=124 // pred_fallthru
          _
        %s408 = sand.u32 %s71, 1
        %s409 = sand.u32 %s71, 1
        %s410 = smul.addr %s409, 8
        %s411 = scalar_lea.vmem [#allocation3], %s410
        // Predicated region
        $region130: #{tpu_custom_call.1} parent=124 // pred_check
          %p412 = pneg %p84
        $region131: #{tpu_custom_call.1} parent=124 // pred_check_branch
          %414 = sbr.rel (%p412) target = $region133
        $region132: #{tpu_custom_call.1} parent=124 // pred_region
          _
        $region133: #{tpu_custom_call.1} parent=124 // pred_fallthru
          _
        %s415 = sand.u32 %s101, 1
        %s416 = sand.u32 %s101, 1
        %s417 = smul.addr %s416, 8
        %s418 = scalar_lea.vmem [#allocation4], %s417
        // Predicated region
        $region134: #{tpu_custom_call.1} parent=124 // pred_check
          %p419 = pneg %p114
        $region135: #{tpu_custom_call.1} parent=124 // pred_check_branch
          %421 = sbr.rel (%p419) target = $region137
        $region136: #{tpu_custom_call.1} parent=124 // pred_region
          _
        $region137: #{tpu_custom_call.1} parent=124 // pred_fallthru
          _
        %s422 = sand.u32 %s41, 1
        %s423 = sand.u32 %s41, 1
        %s424 = smul.addr %s423, 384
        %s425 = scalar_lea.vmem [#allocation2], %s424
        %p426 = pneg %p54
        %p427 = pneg %p51
        %s428 = sand.u32 %s71, 1
        %s429 = sand.u32 %s71, 1
        %s430 = smul.addr %s429, 8
        %s431 = scalar_lea.vmem [#allocation3], %s430
        %p432 = pneg %p84
        %p433 = pneg %p81
        %s434 = sand.u32 %s101, 1
        %s435 = sand.u32 %s101, 1
        %s436 = smul.addr %s435, 8
        %s437 = scalar_lea.vmem [#allocation4], %s436
        %p438 = pneg %p114
        %p439 = pneg %p111
        %p440 = pneg %p140
        %p441 = pneg %p137
        %s442 = sand.u32 %s127, 1
        %s443 = scalar_lea.sflag [#allocation6], %s442
        %s444 = sand.u32 %s127, 1
        %s445 = smul.addr %s444, 8
        %s446 = scalar_lea.vmem [#allocation5], %s445
        %s447 = smul.u32 %s21, 2
        %s448 = sadd.s32 %s447, %s22
        %s449 = smul.u32 4, %s448
        %s450 = smul.u32 %s21, 2
        %s451 = sadd.s32 %s450, %s22
        %s452 = smul.u32 4, %s451
        %s453 = smul.u32 %s21, 2
        %s454 = sadd.s32 %s453, %s22
        %s455 = smul.u32 4, %s454
        %p456 = scmp.eq.s32.totalorder %s22, 0
        // Predicated region
        $region138: #{tpu_custom_call.1} parent=124 // pred_check
          %p457 = pneg %p456
        $region139: #{tpu_custom_call.1} parent=124 // pred_check_branch
          %459 = sbr.rel (%p457) target = $region141
        $region140: #{tpu_custom_call.1} parent=124 // pred_region
          %v460 = vlaneseq
          %vm461 = vcmp.ge.s32.totalorder %v460, 0
          %vm462 = vcmp.lt.s32.totalorder %v460, 512
          %vm463 = vmand %vm461, %vm462
          %464 = vst.msk [vmem:[%s446] sm:$0xf] %vm463, 0.0
          %465 = vst.msk [vmem:[%s446 + $0x4] sm:$0xf] %vm463, 0.0
        $region141: #{tpu_custom_call.1} parent=124 // pred_fallthru
          _
        %v466 = vld [vmem:[%s404] sm:$0xff]
        %v467 = vld [vmem:[%s404 + $0x8] sm:$0xff]
        %v468 = vld [vmem:[%s404 + $0x10] sm:$0xff]
        %v469 = vld [vmem:[%s404 + $0x18] sm:$0xff]
        %v470 = vld [vmem:[%s404 + $0x20] sm:$0x3]
        %v471 = vld [vmem:[%s404 + $0x28] sm:$0x3]
        %v472 = vld [vmem:[%s404 + $0x30] sm:$0x3]
        %v473 = vld [vmem:[%s404 + $0x38] sm:$0x3]
        %v474 = vld [vmem:[%s404 + $0x40] sm:$0xff]
        %v475 = vld [vmem:[%s404 + $0x48] sm:$0xff]
        %v476 = vld [vmem:[%s404 + $0x50] sm:$0xff]
        %v477 = vld [vmem:[%s404 + $0x58] sm:$0xff]
        %v478 = vld [vmem:[%s404 + $0x60] sm:$0x3]
        %v479 = vld [vmem:[%s404 + $0x68] sm:$0x3]
        %v480 = vld [vmem:[%s404 + $0x70] sm:$0x3]
        %v481 = vld [vmem:[%s404 + $0x78] sm:$0x3]
        %v482 = vld [vmem:[%s404 + $0x80] sm:$0xff]
        %v483 = vld [vmem:[%s404 + $0x88] sm:$0xff]
        %v484 = vld [vmem:[%s404 + $0x90] sm:$0xff]
        %v485 = vld [vmem:[%s404 + $0x98] sm:$0xff]
        %v486 = vld [vmem:[%s404 + $0xa0] sm:$0x3]
        %v487 = vld [vmem:[%s404 + $0xa8] sm:$0x3]
        %v488 = vld [vmem:[%s404 + $0xb0] sm:$0x3]
        %v489 = vld [vmem:[%s404 + $0xb8] sm:$0x3]
        %v490 = vld [vmem:[%s404 + $0xc0] sm:$0xff]
        %v491 = vld [vmem:[%s404 + $0xc8] sm:$0xff]
        %v492 = vld [vmem:[%s404 + $0xd0] sm:$0xff]
        %v493 = vld [vmem:[%s404 + $0xd8] sm:$0xff]
        %v494 = vld [vmem:[%s404 + $0xe0] sm:$0x3]
        %v495 = vld [vmem:[%s404 + $0xe8] sm:$0x3]
        %v496 = vld [vmem:[%s404 + $0xf0] sm:$0x3]
        %v497 = vld [vmem:[%s404 + $0xf8] sm:$0x3]
        %v498 = vld [vmem:[%s404 + $0x100] sm:$0xff]
        %v499 = vld [vmem:[%s404 + $0x108] sm:$0xff]
        %v500 = vld [vmem:[%s404 + $0x110] sm:$0xff]
        %v501 = vld [vmem:[%s404 + $0x118] sm:$0xff]
        %v502 = vld [vmem:[%s404 + $0x120] sm:$0x3]
        %v503 = vld [vmem:[%s404 + $0x128] sm:$0x3]
        %v504 = vld [vmem:[%s404 + $0x130] sm:$0x3]
        %v505 = vld [vmem:[%s404 + $0x138] sm:$0x3]
        %v506 = vld [vmem:[%s404 + $0x140] sm:$0xff]
        %v507 = vld [vmem:[%s404 + $0x148] sm:$0xff]
        %v508 = vld [vmem:[%s404 + $0x150] sm:$0xff]
        %v509 = vld [vmem:[%s404 + $0x158] sm:$0xff]
        %v510 = vld [vmem:[%s404 + $0x160] sm:$0x3]
        %v511 = vld [vmem:[%s404 + $0x168] sm:$0x3]
        %v512 = vld [vmem:[%s404 + $0x170] sm:$0x3]
        %v513 = vld [vmem:[%s404 + $0x178] sm:$0x3]
        %v514 = vmax.f32 %v482, -7.0
        %v515 = vmax.f32 %v483, -7.0
        %v516 = vmax.f32 %v484, -7.0
        %v517 = vmax.f32 %v485, -7.0
        %v518 = vmax.f32 %v486, -7.0
        %v519 = vmax.f32 %v487, -7.0
        %v520 = vmax.f32 %v488, -7.0
        %v521 = vmax.f32 %v489, -7.0
        %v522 = vmax.f32 %v506, -7.0
        %v523 = vmax.f32 %v507, -7.0
        %v524 = vmax.f32 %v508, -7.0
        %v525 = vmax.f32 %v509, -7.0
        %v526 = vmax.f32 %v510, -7.0
        %v527 = vmax.f32 %v511, -7.0
        %v528 = vmax.f32 %v512, -7.0
        %v529 = vmax.f32 %v513, -7.0
        %v530 = vld [vmem:[%s411] sm:$0xf]
        %v531 = vld [vmem:[%s411 + $0x4] sm:$0xf]
        %v532 = vld [vmem:[%s418] sm:$0xf]
        %v533 = vld [vmem:[%s418 + $0x4] sm:$0xf]
        %v534 = vsub.f32 0.0, %v514
        %v535 = vsub.f32 0.0, %v515
        %v536 = vsub.f32 0.0, %v516
        %v537 = vsub.f32 0.0, %v517
        %v538 = vsub.f32 0.0, %v518
        %v539 = vsub.f32 0.0, %v519
        %v540 = vsub.f32 0.0, %v520
        %v541 = vsub.f32 0.0, %v521
        %v542 = vsub.f32 0.0, %v522
        %v543 = vsub.f32 0.0, %v523
        %v544 = vsub.f32 0.0, %v524
        %v545 = vsub.f32 0.0, %v525
        %v546 = vsub.f32 0.0, %v526
        %v547 = vsub.f32 0.0, %v527
        %v548 = vsub.f32 0.0, %v528
        %v549 = vsub.f32 0.0, %v529
        %v550 = vmul.f32 %v534, 1.442695
        %v551 = vpow.pop %v550
        %v552 = vmul.f32 %v535, 1.442695
        %v553 = vpow.pop %v552
        %v554 = vmul.f32 %v536, 1.442695
        %v555 = vpow.pop %v554
        %v556 = vmul.f32 %v537, 1.442695
        %v557 = vpow.pop %v556
        %v558 = vmul.f32 %v538, 1.442695
        %v559 = vpow.pop %v558
        %v560 = vmul.f32 %v539, 1.442695
        %v561 = vpow.pop %v560
        %v562 = vmul.f32 %v540, 1.442695
        %v563 = vpow.pop %v562
        %v564 = vmul.f32 %v541, 1.442695
        %v565 = vpow.pop %v564
        %v566 = vmul.f32 %v542, 1.442695
        %v567 = vpow.pop %v566
        %v568 = vmul.f32 %v543, 1.442695
        %v569 = vpow.pop %v568
        %v570 = vmul.f32 %v544, 1.442695
        %v571 = vpow.pop %v570
        %v572 = vmul.f32 %v545, 1.442695
        %v573 = vpow.pop %v572
        %v574 = vmul.f32 %v546, 1.442695
        %v575 = vpow.pop %v574
        %v576 = vmul.f32 %v547, 1.442695
        %v577 = vpow.pop %v576
        %v578 = vmul.f32 %v548, 1.442695
        %v579 = vpow.pop %v578
        %v580 = vmul.f32 %v549, 1.442695
        %v581 = vpow.pop %v580
        %v584 = vperm.slane %v530, 0
        %v585 = vperm.slane %v530, 1
        %v586 = vperm.slane %v530, 2
        %v587 = vperm.slane %v530, 3
        %v588 = vperm.slane %v531, 0
        %v589 = vperm.slane %v531, 1
        %v590 = vperm.slane %v531, 2
        %v591 = vperm.slane %v531, 3
        %v600 = vsub.f32 %v584, %v474
        %v601 = vsub.f32 %v585, %v475
        %v602 = vsub.f32 %v586, %v476
        %v603 = vsub.f32 %v587, %v477
        %v604 = vsub.f32 %v584, %v478
        %v605 = vsub.f32 %v585, %v479
        %v606 = vsub.f32 %v586, %v480
        %v607 = vsub.f32 %v587, %v481
        %v608 = vsub.f32 %v588, %v498
        %v609 = vsub.f32 %v589, %v499
        %v610 = vsub.f32 %v590, %v500
        %v611 = vsub.f32 %v591, %v501
        %v612 = vsub.f32 %v588, %v502
        %v613 = vsub.f32 %v589, %v503
        %v614 = vsub.f32 %v590, %v504
        %v615 = vsub.f32 %v591, %v505
        %v616 = vmul.f32 %v551, %v600
        %v617 = vmul.f32 %v553, %v601
        %v618 = vmul.f32 %v555, %v602
        %v619 = vmul.f32 %v557, %v603
        %v620 = vmul.f32 %v559, %v604
        %v621 = vmul.f32 %v561, %v605
        %v622 = vmul.f32 %v563, %v606
        %v623 = vmul.f32 %v565, %v607
        %v624 = vmul.f32 %v567, %v608
        %v625 = vmul.f32 %v569, %v609
        %v626 = vmul.f32 %v571, %v610
        %v627 = vmul.f32 %v573, %v611
        %v628 = vmul.f32 %v575, %v612
        %v629 = vmul.f32 %v577, %v613
        %v630 = vmul.f32 %v579, %v614
        %v631 = vmul.f32 %v581, %v615
        %v632 = vmul.f32 %v551, 0.003921569
        %v633 = vmul.f32 %v553, 0.003921569
        %v634 = vmul.f32 %v555, 0.003921569
        %v635 = vmul.f32 %v557, 0.003921569
        %v636 = vmul.f32 %v559, 0.003921569
        %v637 = vmul.f32 %v561, 0.003921569
        %v638 = vmul.f32 %v563, 0.003921569
        %v639 = vmul.f32 %v565, 0.003921569
        %v640 = vmul.f32 %v567, 0.003921569
        %v641 = vmul.f32 %v569, 0.003921569
        %v642 = vmul.f32 %v571, 0.003921569
        %v643 = vmul.f32 %v573, 0.003921569
        %v644 = vmul.f32 %v575, 0.003921569
        %v645 = vmul.f32 %v577, 0.003921569
        %v646 = vmul.f32 %v579, 0.003921569
        %v647 = vmul.f32 %v581, 0.003921569
        %v648 = vadd.f32 %v616, %v632
        %v649 = vadd.f32 %v617, %v633
        %v650 = vadd.f32 %v618, %v634
        %v651 = vadd.f32 %v619, %v635
        %v652 = vadd.f32 %v620, %v636
        %v653 = vadd.f32 %v621, %v637
        %v654 = vadd.f32 %v622, %v638
        %v655 = vadd.f32 %v623, %v639
        %v656 = vadd.f32 %v624, %v640
        %v657 = vadd.f32 %v625, %v641
        %v658 = vadd.f32 %v626, %v642
        %v659 = vadd.f32 %v627, %v643
        %v660 = vadd.f32 %v628, %v644
        %v661 = vadd.f32 %v629, %v645
        %v662 = vadd.f32 %v630, %v646
        %v663 = vadd.f32 %v631, %v647
        %v664 = vsub.f32 %v616, %v632
        %v665 = vsub.f32 %v617, %v633
        %v666 = vsub.f32 %v618, %v634
        %v667 = vsub.f32 %v619, %v635
        %v668 = vsub.f32 %v620, %v636
        %v669 = vsub.f32 %v621, %v637
        %v670 = vsub.f32 %v622, %v638
        %v671 = vsub.f32 %v623, %v639
        %v672 = vsub.f32 %v624, %v640
        %v673 = vsub.f32 %v625, %v641
        %v674 = vsub.f32 %v626, %v642
        %v675 = vsub.f32 %v627, %v643
        %v676 = vsub.f32 %v628, %v644
        %v677 = vsub.f32 %v629, %v645
        %v678 = vsub.f32 %v630, %v646
        %v679 = vsub.f32 %v631, %v647
        %v680 = vmax.f32 %v648, 0.0
        %v681 = vmax.f32 %v649, 0.0
        %v682 = vmax.f32 %v650, 0.0
        %v683 = vmax.f32 %v651, 0.0
        %v684 = vmax.f32 %v652, 0.0
        %v685 = vmax.f32 %v653, 0.0
        %v686 = vmax.f32 %v654, 0.0
        %v687 = vmax.f32 %v655, 0.0
        %v688 = vmax.f32 %v656, 0.0
        %v689 = vmax.f32 %v657, 0.0
        %v690 = vmax.f32 %v658, 0.0
        %v691 = vmax.f32 %v659, 0.0
        %v692 = vmax.f32 %v660, 0.0
        %v693 = vmax.f32 %v661, 0.0
        %v694 = vmax.f32 %v662, 0.0
        %v695 = vmax.f32 %v663, 0.0
        %vm696 = vcmp.ne.f32.partialorder %v648, %v648
        %vm697 = vcmp.ne.f32.partialorder %v649, %v649
        %vm698 = vcmp.ne.f32.partialorder %v650, %v650
        %vm699 = vcmp.ne.f32.partialorder %v651, %v651
        %vm700 = vcmp.ne.f32.partialorder %v652, %v652
        %vm701 = vcmp.ne.f32.partialorder %v653, %v653
        %vm702 = vcmp.ne.f32.partialorder %v654, %v654
        %vm703 = vcmp.ne.f32.partialorder %v655, %v655
        %vm704 = vcmp.ne.f32.partialorder %v656, %v656
        %vm705 = vcmp.ne.f32.partialorder %v657, %v657
        %vm706 = vcmp.ne.f32.partialorder %v658, %v658
        %vm707 = vcmp.ne.f32.partialorder %v659, %v659
        %vm708 = vcmp.ne.f32.partialorder %v660, %v660
        %vm709 = vcmp.ne.f32.partialorder %v661, %v661
        %vm710 = vcmp.ne.f32.partialorder %v662, %v662
        %vm711 = vcmp.ne.f32.partialorder %v663, %v663
        %v712 = vadd.f32 %v648, 0.0
        %v713 = vadd.f32 %v649, 0.0
        %v714 = vadd.f32 %v650, 0.0
        %v715 = vadd.f32 %v651, 0.0
        %v716 = vadd.f32 %v652, 0.0
        %v717 = vadd.f32 %v653, 0.0
        %v718 = vadd.f32 %v654, 0.0
        %v719 = vadd.f32 %v655, 0.0
        %v720 = vadd.f32 %v656, 0.0
        %v721 = vadd.f32 %v657, 0.0
        %v722 = vadd.f32 %v658, 0.0
        %v723 = vadd.f32 %v659, 0.0
        %v724 = vadd.f32 %v660, 0.0
        %v725 = vadd.f32 %v661, 0.0
        %v726 = vadd.f32 %v662, 0.0
        %v727 = vadd.f32 %v663, 0.0
        %v728 = vand.u32 2147483647, %v648
        %v729 = vand.u32 2147483647, %v649
        %v730 = vand.u32 2147483647, %v650
        %v731 = vand.u32 2147483647, %v651
        %v732 = vand.u32 2147483647, %v652
        %v733 = vand.u32 2147483647, %v653
        %v734 = vand.u32 2147483647, %v654
        %v735 = vand.u32 2147483647, %v655
        %v736 = vand.u32 2147483647, %v656
        %v737 = vand.u32 2147483647, %v657
        %v738 = vand.u32 2147483647, %v658
        %v739 = vand.u32 2147483647, %v659
        %v740 = vand.u32 2147483647, %v660
        %v741 = vand.u32 2147483647, %v661
        %v742 = vand.u32 2147483647, %v662
        %v743 = vand.u32 2147483647, %v663
        %v744 = vsub.f32 0.0, %v728
        %v745 = vsub.f32 0.0, %v729
        %v746 = vsub.f32 0.0, %v730
        %v747 = vsub.f32 0.0, %v731
        %v748 = vsub.f32 0.0, %v732
        %v749 = vsub.f32 0.0, %v733
        %v750 = vsub.f32 0.0, %v734
        %v751 = vsub.f32 0.0, %v735
        %v752 = vsub.f32 0.0, %v736
        %v753 = vsub.f32 0.0, %v737
        %v754 = vsub.f32 0.0, %v738
        %v755 = vsub.f32 0.0, %v739
        %v756 = vsub.f32 0.0, %v740
        %v757 = vsub.f32 0.0, %v741
        %v758 = vsub.f32 0.0, %v742
        %v759 = vsub.f32 0.0, %v743
        %v760 = vmul.f32 %v744, 1.442695
        %v761 = vpow.pop %v760
        %v762 = vmul.f32 %v745, 1.442695
        %v763 = vpow.pop %v762
        %v764 = vmul.f32 %v746, 1.442695
        %v765 = vpow.pop %v764
        %v766 = vmul.f32 %v747, 1.442695
        %v767 = vpow.pop %v766
        %v768 = vmul.f32 %v748, 1.442695
        %v769 = vpow.pop %v768
        %v770 = vmul.f32 %v749, 1.442695
        %v771 = vpow.pop %v770
        %v772 = vmul.f32 %v750, 1.442695
        %v773 = vpow.pop %v772
        %v774 = vmul.f32 %v751, 1.442695
        %v775 = vpow.pop %v774
        %v776 = vmul.f32 %v752, 1.442695
        %v777 = vpow.pop %v776
        %v778 = vmul.f32 %v753, 1.442695
        %v779 = vpow.pop %v778
        %v780 = vmul.f32 %v754, 1.442695
        %v781 = vpow.pop %v780
        %v782 = vmul.f32 %v755, 1.442695
        %v783 = vpow.pop %v782
        %v784 = vmul.f32 %v756, 1.442695
        %v785 = vpow.pop %v784
        %v786 = vmul.f32 %v757, 1.442695
        %v787 = vpow.pop %v786
        %v788 = vmul.f32 %v758, 1.442695
        %v789 = vpow.pop %v788
        %v790 = vmul.f32 %v759, 1.442695
        %v791 = vpow.pop %v790
        %v792 = vadd.f32 %v761, 1.0
        %v793 = vlog2.pop %v792
        %v794 = vmul.f32 %v793, 0.6931472
        %v795 = vmul.f32 -0.5, %v761
        %v796 = vadd.f32 %v795, 1.0
        %v797 = vmul.f32 %v796, %v761
        %v798 = vand.u32 2147483647, %v761
        %vm799 = vcmp.lt.f32.partialorder %v798, 0.0004427343
        %v800 = vsel %vm799, %v797, %v794
        %v801 = vadd.f32 %v763, 1.0
        %v802 = vlog2.pop %v801
        %v803 = vmul.f32 %v802, 0.6931472
        %v804 = vmul.f32 -0.5, %v763
        %v805 = vadd.f32 %v804, 1.0
        %v806 = vmul.f32 %v805, %v763
        %v807 = vand.u32 2147483647, %v763
        %vm808 = vcmp.lt.f32.partialorder %v807, 0.0004427343
        %v809 = vsel %vm808, %v806, %v803
        %v810 = vadd.f32 %v765, 1.0
        %v811 = vlog2.pop %v810
        %v812 = vmul.f32 %v811, 0.6931472
        %v813 = vmul.f32 -0.5, %v765
        %v814 = vadd.f32 %v813, 1.0
        %v815 = vmul.f32 %v814, %v765
        %v816 = vand.u32 2147483647, %v765
        %vm817 = vcmp.lt.f32.partialorder %v816, 0.0004427343
        %v818 = vsel %vm817, %v815, %v812
        %v819 = vadd.f32 %v767, 1.0
        %v820 = vlog2.pop %v819
        %v821 = vmul.f32 %v820, 0.6931472
        %v822 = vmul.f32 -0.5, %v767
        %v823 = vadd.f32 %v822, 1.0
        %v824 = vmul.f32 %v823, %v767
        %v825 = vand.u32 2147483647, %v767
        %vm826 = vcmp.lt.f32.partialorder %v825, 0.0004427343
        %v827 = vsel %vm826, %v824, %v821
        %v828 = vadd.f32 %v769, 1.0
        %v829 = vlog2.pop %v828
        %v830 = vmul.f32 %v829, 0.6931472
        %v831 = vmul.f32 -0.5, %v769
        %v832 = vadd.f32 %v831, 1.0
        %v833 = vmul.f32 %v832, %v769
        %v834 = vand.u32 2147483647, %v769
        %vm835 = vcmp.lt.f32.partialorder %v834, 0.0004427343
        %v836 = vsel %vm835, %v833, %v830
        %v837 = vadd.f32 %v771, 1.0
        %v838 = vlog2.pop %v837
        %v839 = vmul.f32 %v838, 0.6931472
        %v840 = vmul.f32 -0.5, %v771
        %v841 = vadd.f32 %v840, 1.0
        %v842 = vmul.f32 %v841, %v771
        %v843 = vand.u32 2147483647, %v771
        %vm844 = vcmp.lt.f32.partialorder %v843, 0.0004427343
        %v845 = vsel %vm844, %v842, %v839
        %v846 = vadd.f32 %v773, 1.0
        %v847 = vlog2.pop %v846
        %v848 = vmul.f32 %v847, 0.6931472
        %v849 = vmul.f32 -0.5, %v773
        %v850 = vadd.f32 %v849, 1.0
        %v851 = vmul.f32 %v850, %v773
        %v852 = vand.u32 2147483647, %v773
        %vm853 = vcmp.lt.f32.partialorder %v852, 0.0004427343
        %v854 = vsel %vm853, %v851, %v848
        %v855 = vadd.f32 %v775, 1.0
        %v856 = vlog2.pop %v855
        %v857 = vmul.f32 %v856, 0.6931472
        %v858 = vmul.f32 -0.5, %v775
        %v859 = vadd.f32 %v858, 1.0
        %v860 = vmul.f32 %v859, %v775
        %v861 = vand.u32 2147483647, %v775
        %vm862 = vcmp.lt.f32.partialorder %v861, 0.0004427343
        %v863 = vsel %vm862, %v860, %v857
        %v864 = vadd.f32 %v777, 1.0
        %v865 = vlog2.pop %v864
        %v866 = vmul.f32 %v865, 0.6931472
        %v867 = vmul.f32 -0.5, %v777
        %v868 = vadd.f32 %v867, 1.0
        %v869 = vmul.f32 %v868, %v777
        %v870 = vand.u32 2147483647, %v777
        %vm871 = vcmp.lt.f32.partialorder %v870, 0.0004427343
        %v872 = vsel %vm871, %v869, %v866
        %v873 = vadd.f32 %v779, 1.0
        %v874 = vlog2.pop %v873
        %v875 = vmul.f32 %v874, 0.6931472
        %v876 = vmul.f32 -0.5, %v779
        %v877 = vadd.f32 %v876, 1.0
        %v878 = vmul.f32 %v877, %v779
        %v879 = vand.u32 2147483647, %v779
        %vm880 = vcmp.lt.f32.partialorder %v879, 0.0004427343
        %v881 = vsel %vm880, %v878, %v875
        %v882 = vadd.f32 %v781, 1.0
        %v883 = vlog2.pop %v882
        %v884 = vmul.f32 %v883, 0.6931472
        %v885 = vmul.f32 -0.5, %v781
        %v886 = vadd.f32 %v885, 1.0
        %v887 = vmul.f32 %v886, %v781
        %v888 = vand.u32 2147483647, %v781
        %vm889 = vcmp.lt.f32.partialorder %v888, 0.0004427343
        %v890 = vsel %vm889, %v887, %v884
        %v891 = vadd.f32 %v783, 1.0
        %v892 = vlog2.pop %v891
        %v893 = vmul.f32 %v892, 0.6931472
        %v894 = vmul.f32 -0.5, %v783
        %v895 = vadd.f32 %v894, 1.0
        %v896 = vmul.f32 %v895, %v783
        %v897 = vand.u32 2147483647, %v783
        %vm898 = vcmp.lt.f32.partialorder %v897, 0.0004427343
        %v899 = vsel %vm898, %v896, %v893
        %v900 = vadd.f32 %v785, 1.0
        %v901 = vlog2.pop %v900
        %v902 = vmul.f32 %v901, 0.6931472
        %v903 = vmul.f32 -0.5, %v785
        %v904 = vadd.f32 %v903, 1.0
        %v905 = vmul.f32 %v904, %v785
        %v906 = vand.u32 2147483647, %v785
        %vm907 = vcmp.lt.f32.partialorder %v906, 0.0004427343
        %v908 = vsel %vm907, %v905, %v902
        %v909 = vadd.f32 %v787, 1.0
        %v910 = vlog2.pop %v909
        %v911 = vmul.f32 %v910, 0.6931472
        %v912 = vmul.f32 -0.5, %v787
        %v913 = vadd.f32 %v912, 1.0
        %v914 = vmul.f32 %v913, %v787
        %v915 = vand.u32 2147483647, %v787
        %vm916 = vcmp.lt.f32.partialorder %v915, 0.0004427343
        %v917 = vsel %vm916, %v914, %v911
        %v918 = vadd.f32 %v789, 1.0
        %v919 = vlog2.pop %v918
        %v920 = vmul.f32 %v919, 0.6931472
        %v921 = vmul.f32 -0.5, %v789
        %v922 = vadd.f32 %v921, 1.0
        %v923 = vmul.f32 %v922, %v789
        %v924 = vand.u32 2147483647, %v789
        %vm925 = vcmp.lt.f32.partialorder %v924, 0.0004427343
        %v926 = vsel %vm925, %v923, %v920
        %v927 = vadd.f32 %v791, 1.0
        %v928 = vlog2.pop %v927
        %v929 = vmul.f32 %v928, 0.6931472
        %v930 = vmul.f32 -0.5, %v791
        %v931 = vadd.f32 %v930, 1.0
        %v932 = vmul.f32 %v931, %v791
        %v933 = vand.u32 2147483647, %v791
        %vm934 = vcmp.lt.f32.partialorder %v933, 0.0004427343
        %v935 = vsel %vm934, %v932, %v929
        %v936 = vadd.f32 %v680, %v800
        %v937 = vadd.f32 %v681, %v809
        %v938 = vadd.f32 %v682, %v818
        %v939 = vadd.f32 %v683, %v827
        %v940 = vadd.f32 %v684, %v836
        %v941 = vadd.f32 %v685, %v845
        %v942 = vadd.f32 %v686, %v854
        %v943 = vadd.f32 %v687, %v863
        %v944 = vadd.f32 %v688, %v872
        %v945 = vadd.f32 %v689, %v881
        %v946 = vadd.f32 %v690, %v890
        %v947 = vadd.f32 %v691, %v899
        %v948 = vadd.f32 %v692, %v908
        %v949 = vadd.f32 %v693, %v917
        %v950 = vadd.f32 %v694, %v926
        %v951 = vadd.f32 %v695, %v935
        %v952 = vsel %vm696, %v712, %v936
        %v953 = vsel %vm697, %v713, %v937
        %v954 = vsel %vm698, %v714, %v938
        %v955 = vsel %vm699, %v715, %v939
        %v956 = vsel %vm700, %v716, %v940
        %v957 = vsel %vm701, %v717, %v941
        %v958 = vsel %vm702, %v718, %v942
        %v959 = vsel %vm703, %v719, %v943
        %v960 = vsel %vm704, %v720, %v944
        %v961 = vsel %vm705, %v721, %v945
        %v962 = vsel %vm706, %v722, %v946
        %v963 = vsel %vm707, %v723, %v947
        %v964 = vsel %vm708, %v724, %v948
        %v965 = vsel %vm709, %v725, %v949
        %v966 = vsel %vm710, %v726, %v950
        %v967 = vsel %vm711, %v727, %v951
        %v968 = vmax.f32 %v664, 0.0
        %v969 = vmax.f32 %v665, 0.0
        %v970 = vmax.f32 %v666, 0.0
        %v971 = vmax.f32 %v667, 0.0
        %v972 = vmax.f32 %v668, 0.0
        %v973 = vmax.f32 %v669, 0.0
        %v974 = vmax.f32 %v670, 0.0
        %v975 = vmax.f32 %v671, 0.0
        %v976 = vmax.f32 %v672, 0.0
        %v977 = vmax.f32 %v673, 0.0
        %v978 = vmax.f32 %v674, 0.0
        %v979 = vmax.f32 %v675, 0.0
        %v980 = vmax.f32 %v676, 0.0
        %v981 = vmax.f32 %v677, 0.0
        %v982 = vmax.f32 %v678, 0.0
        %v983 = vmax.f32 %v679, 0.0
        %vm984 = vcmp.ne.f32.partialorder %v664, %v664
        %vm985 = vcmp.ne.f32.partialorder %v665, %v665
        %vm986 = vcmp.ne.f32.partialorder %v666, %v666
        %vm987 = vcmp.ne.f32.partialorder %v667, %v667
        %vm988 = vcmp.ne.f32.partialorder %v668, %v668
        %vm989 = vcmp.ne.f32.partialorder %v669, %v669
        %vm990 = vcmp.ne.f32.partialorder %v670, %v670
        %vm991 = vcmp.ne.f32.partialorder %v671, %v671
        %vm992 = vcmp.ne.f32.partialorder %v672, %v672
        %vm993 = vcmp.ne.f32.partialorder %v673, %v673
        %vm994 = vcmp.ne.f32.partialorder %v674, %v674
        %vm995 = vcmp.ne.f32.partialorder %v675, %v675
        %vm996 = vcmp.ne.f32.partialorder %v676, %v676
        %vm997 = vcmp.ne.f32.partialorder %v677, %v677
        %vm998 = vcmp.ne.f32.partialorder %v678, %v678
        %vm999 = vcmp.ne.f32.partialorder %v679, %v679
        %v1000 = vadd.f32 %v664, 0.0
        %v1001 = vadd.f32 %v665, 0.0
        %v1002 = vadd.f32 %v666, 0.0
        %v1003 = vadd.f32 %v667, 0.0
        %v1004 = vadd.f32 %v668, 0.0
        %v1005 = vadd.f32 %v669, 0.0
        %v1006 = vadd.f32 %v670, 0.0
        %v1007 = vadd.f32 %v671, 0.0
        %v1008 = vadd.f32 %v672, 0.0
        %v1009 = vadd.f32 %v673, 0.0
        %v1010 = vadd.f32 %v674, 0.0
        %v1011 = vadd.f32 %v675, 0.0
        %v1012 = vadd.f32 %v676, 0.0
        %v1013 = vadd.f32 %v677, 0.0
        %v1014 = vadd.f32 %v678, 0.0
        %v1015 = vadd.f32 %v679, 0.0
        %v1016 = vand.u32 2147483647, %v664
        %v1017 = vand.u32 2147483647, %v665
        %v1018 = vand.u32 2147483647, %v666
        %v1019 = vand.u32 2147483647, %v667
        %v1020 = vand.u32 2147483647, %v668
        %v1021 = vand.u32 2147483647, %v669
        %v1022 = vand.u32 2147483647, %v670
        %v1023 = vand.u32 2147483647, %v671
        %v1024 = vand.u32 2147483647, %v672
        %v1025 = vand.u32 2147483647, %v673
        %v1026 = vand.u32 2147483647, %v674
        %v1027 = vand.u32 2147483647, %v675
        %v1028 = vand.u32 2147483647, %v676
        %v1029 = vand.u32 2147483647, %v677
        %v1030 = vand.u32 2147483647, %v678
        %v1031 = vand.u32 2147483647, %v679
        %v1032 = vsub.f32 0.0, %v1016
        %v1033 = vsub.f32 0.0, %v1017
        %v1034 = vsub.f32 0.0, %v1018
        %v1035 = vsub.f32 0.0, %v1019
        %v1036 = vsub.f32 0.0, %v1020
        %v1037 = vsub.f32 0.0, %v1021
        %v1038 = vsub.f32 0.0, %v1022
        %v1039 = vsub.f32 0.0, %v1023
        %v1040 = vsub.f32 0.0, %v1024
        %v1041 = vsub.f32 0.0, %v1025
        %v1042 = vsub.f32 0.0, %v1026
        %v1043 = vsub.f32 0.0, %v1027
        %v1044 = vsub.f32 0.0, %v1028
        %v1045 = vsub.f32 0.0, %v1029
        %v1046 = vsub.f32 0.0, %v1030
        %v1047 = vsub.f32 0.0, %v1031
        %v1048 = vmul.f32 %v1032, 1.442695
        %v1049 = vpow.pop %v1048
        %v1050 = vmul.f32 %v1033, 1.442695
        %v1051 = vpow.pop %v1050
        %v1052 = vmul.f32 %v1034, 1.442695
        %v1053 = vpow.pop %v1052
        %v1054 = vmul.f32 %v1035, 1.442695
        %v1055 = vpow.pop %v1054
        %v1056 = vmul.f32 %v1036, 1.442695
        %v1057 = vpow.pop %v1056
        %v1058 = vmul.f32 %v1037, 1.442695
        %v1059 = vpow.pop %v1058
        %v1060 = vmul.f32 %v1038, 1.442695
        %v1061 = vpow.pop %v1060
        %v1062 = vmul.f32 %v1039, 1.442695
        %v1063 = vpow.pop %v1062
        %v1064 = vmul.f32 %v1040, 1.442695
        %v1065 = vpow.pop %v1064
        %v1066 = vmul.f32 %v1041, 1.442695
        %v1067 = vpow.pop %v1066
        %v1068 = vmul.f32 %v1042, 1.442695
        %v1069 = vpow.pop %v1068
        %v1070 = vmul.f32 %v1043, 1.442695
        %v1071 = vpow.pop %v1070
        %v1072 = vmul.f32 %v1044, 1.442695
        %v1073 = vpow.pop %v1072
        %v1074 = vmul.f32 %v1045, 1.442695
        %v1075 = vpow.pop %v1074
        %v1076 = vmul.f32 %v1046, 1.442695
        %v1077 = vpow.pop %v1076
        %v1078 = vmul.f32 %v1047, 1.442695
        %v1079 = vpow.pop %v1078
        %v1080 = vadd.f32 %v1049, 1.0
        %v1081 = vlog2.pop %v1080
        %v1082 = vmul.f32 %v1081, 0.6931472
        %v1083 = vmul.f32 -0.5, %v1049
        %v1084 = vadd.f32 %v1083, 1.0
        %v1085 = vmul.f32 %v1084, %v1049
        %v1086 = vand.u32 2147483647, %v1049
        %vm1087 = vcmp.lt.f32.partialorder %v1086, 0.0004427343
        %v1088 = vsel %vm1087, %v1085, %v1082
        %v1089 = vadd.f32 %v1051, 1.0
        %v1090 = vlog2.pop %v1089
        %v1091 = vmul.f32 %v1090, 0.6931472
        %v1092 = vmul.f32 -0.5, %v1051
        %v1093 = vadd.f32 %v1092, 1.0
        %v1094 = vmul.f32 %v1093, %v1051
        %v1095 = vand.u32 2147483647, %v1051
        %vm1096 = vcmp.lt.f32.partialorder %v1095, 0.0004427343
        %v1097 = vsel %vm1096, %v1094, %v1091
        %v1098 = vadd.f32 %v1053, 1.0
        %v1099 = vlog2.pop %v1098
        %v1100 = vmul.f32 %v1099, 0.6931472
        %v1101 = vmul.f32 -0.5, %v1053
        %v1102 = vadd.f32 %v1101, 1.0
        %v1103 = vmul.f32 %v1102, %v1053
        %v1104 = vand.u32 2147483647, %v1053
        %vm1105 = vcmp.lt.f32.partialorder %v1104, 0.0004427343
        %v1106 = vsel %vm1105, %v1103, %v1100
        %v1107 = vadd.f32 %v1055, 1.0
        %v1108 = vlog2.pop %v1107
        %v1109 = vmul.f32 %v1108, 0.6931472
        %v1110 = vmul.f32 -0.5, %v1055
        %v1111 = vadd.f32 %v1110, 1.0
        %v1112 = vmul.f32 %v1111, %v1055
        %v1113 = vand.u32 2147483647, %v1055
        %vm1114 = vcmp.lt.f32.partialorder %v1113, 0.0004427343
        %v1115 = vsel %vm1114, %v1112, %v1109
        %v1116 = vadd.f32 %v1057, 1.0
        %v1117 = vlog2.pop %v1116
        %v1118 = vmul.f32 %v1117, 0.6931472
        %v1119 = vmul.f32 -0.5, %v1057
        %v1120 = vadd.f32 %v1119, 1.0
        %v1121 = vmul.f32 %v1120, %v1057
        %v1122 = vand.u32 2147483647, %v1057
        %vm1123 = vcmp.lt.f32.partialorder %v1122, 0.0004427343
        %v1124 = vsel %vm1123, %v1121, %v1118
        %v1125 = vadd.f32 %v1059, 1.0
        %v1126 = vlog2.pop %v1125
        %v1127 = vmul.f32 %v1126, 0.6931472
        %v1128 = vmul.f32 -0.5, %v1059
        %v1129 = vadd.f32 %v1128, 1.0
        %v1130 = vmul.f32 %v1129, %v1059
        %v1131 = vand.u32 2147483647, %v1059
        %vm1132 = vcmp.lt.f32.partialorder %v1131, 0.0004427343
        %v1133 = vsel %vm1132, %v1130, %v1127
        %v1134 = vadd.f32 %v1061, 1.0
        %v1135 = vlog2.pop %v1134
        %v1136 = vmul.f32 %v1135, 0.6931472
        %v1137 = vmul.f32 -0.5, %v1061
        %v1138 = vadd.f32 %v1137, 1.0
        %v1139 = vmul.f32 %v1138, %v1061
        %v1140 = vand.u32 2147483647, %v1061
        %vm1141 = vcmp.lt.f32.partialorder %v1140, 0.0004427343
        %v1142 = vsel %vm1141, %v1139, %v1136
        %v1143 = vadd.f32 %v1063, 1.0
        %v1144 = vlog2.pop %v1143
        %v1145 = vmul.f32 %v1144, 0.6931472
        %v1146 = vmul.f32 -0.5, %v1063
        %v1147 = vadd.f32 %v1146, 1.0
        %v1148 = vmul.f32 %v1147, %v1063
        %v1149 = vand.u32 2147483647, %v1063
        %vm1150 = vcmp.lt.f32.partialorder %v1149, 0.0004427343
        %v1151 = vsel %vm1150, %v1148, %v1145
        %v1152 = vadd.f32 %v1065, 1.0
        %v1153 = vlog2.pop %v1152
        %v1154 = vmul.f32 %v1153, 0.6931472
        %v1155 = vmul.f32 -0.5, %v1065
        %v1156 = vadd.f32 %v1155, 1.0
        %v1157 = vmul.f32 %v1156, %v1065
        %v1158 = vand.u32 2147483647, %v1065
        %vm1159 = vcmp.lt.f32.partialorder %v1158, 0.0004427343
        %v1160 = vsel %vm1159, %v1157, %v1154
        %v1161 = vadd.f32 %v1067, 1.0
        %v1162 = vlog2.pop %v1161
        %v1163 = vmul.f32 %v1162, 0.6931472
        %v1164 = vmul.f32 -0.5, %v1067
        %v1165 = vadd.f32 %v1164, 1.0
        %v1166 = vmul.f32 %v1165, %v1067
        %v1167 = vand.u32 2147483647, %v1067
        %vm1168 = vcmp.lt.f32.partialorder %v1167, 0.0004427343
        %v1169 = vsel %vm1168, %v1166, %v1163
        %v1170 = vadd.f32 %v1069, 1.0
        %v1171 = vlog2.pop %v1170
        %v1172 = vmul.f32 %v1171, 0.6931472
        %v1173 = vmul.f32 -0.5, %v1069
        %v1174 = vadd.f32 %v1173, 1.0
        %v1175 = vmul.f32 %v1174, %v1069
        %v1176 = vand.u32 2147483647, %v1069
        %vm1177 = vcmp.lt.f32.partialorder %v1176, 0.0004427343
        %v1178 = vsel %vm1177, %v1175, %v1172
        %v1179 = vadd.f32 %v1071, 1.0
        %v1180 = vlog2.pop %v1179
        %v1181 = vmul.f32 %v1180, 0.6931472
        %v1182 = vmul.f32 -0.5, %v1071
        %v1183 = vadd.f32 %v1182, 1.0
        %v1184 = vmul.f32 %v1183, %v1071
        %v1185 = vand.u32 2147483647, %v1071
        %vm1186 = vcmp.lt.f32.partialorder %v1185, 0.0004427343
        %v1187 = vsel %vm1186, %v1184, %v1181
        %v1188 = vadd.f32 %v1073, 1.0
        %v1189 = vlog2.pop %v1188
        %v1190 = vmul.f32 %v1189, 0.6931472
        %v1191 = vmul.f32 -0.5, %v1073
        %v1192 = vadd.f32 %v1191, 1.0
        %v1193 = vmul.f32 %v1192, %v1073
        %v1194 = vand.u32 2147483647, %v1073
        %vm1195 = vcmp.lt.f32.partialorder %v1194, 0.0004427343
        %v1196 = vsel %vm1195, %v1193, %v1190
        %v1197 = vadd.f32 %v1075, 1.0
        %v1198 = vlog2.pop %v1197
        %v1199 = vmul.f32 %v1198, 0.6931472
        %v1200 = vmul.f32 -0.5, %v1075
        %v1201 = vadd.f32 %v1200, 1.0
        %v1202 = vmul.f32 %v1201, %v1075
        %v1203 = vand.u32 2147483647, %v1075
        %vm1204 = vcmp.lt.f32.partialorder %v1203, 0.0004427343
        %v1205 = vsel %vm1204, %v1202, %v1199
        %v1206 = vadd.f32 %v1077, 1.0
        %v1207 = vlog2.pop %v1206
        %v1208 = vmul.f32 %v1207, 0.6931472
        %v1209 = vmul.f32 -0.5, %v1077
        %v1210 = vadd.f32 %v1209, 1.0
        %v1211 = vmul.f32 %v1210, %v1077
        %v1212 = vand.u32 2147483647, %v1077
        %vm1213 = vcmp.lt.f32.partialorder %v1212, 0.0004427343
        %v1214 = vsel %vm1213, %v1211, %v1208
        %v1215 = vadd.f32 %v1079, 1.0
        %v1216 = vlog2.pop %v1215
        %v1217 = vmul.f32 %v1216, 0.6931472
        %v1218 = vmul.f32 -0.5, %v1079
        %v1219 = vadd.f32 %v1218, 1.0
        %v1220 = vmul.f32 %v1219, %v1079
        %v1221 = vand.u32 2147483647, %v1079
        %vm1222 = vcmp.lt.f32.partialorder %v1221, 0.0004427343
        %v1223 = vsel %vm1222, %v1220, %v1217
        %v1224 = vadd.f32 %v968, %v1088
        %v1225 = vadd.f32 %v969, %v1097
        %v1226 = vadd.f32 %v970, %v1106
        %v1227 = vadd.f32 %v971, %v1115
        %v1228 = vadd.f32 %v972, %v1124
        %v1229 = vadd.f32 %v973, %v1133
        %v1230 = vadd.f32 %v974, %v1142
        %v1231 = vadd.f32 %v975, %v1151
        %v1232 = vadd.f32 %v976, %v1160
        %v1233 = vadd.f32 %v977, %v1169
        %v1234 = vadd.f32 %v978, %v1178
        %v1235 = vadd.f32 %v979, %v1187
        %v1236 = vadd.f32 %v980, %v1196
        %v1237 = vadd.f32 %v981, %v1205
        %v1238 = vadd.f32 %v982, %v1214
        %v1239 = vadd.f32 %v983, %v1223
        %v1240 = vsel %vm984, %v1000, %v1224
        %v1241 = vsel %vm985, %v1001, %v1225
        %v1242 = vsel %vm986, %v1002, %v1226
        %v1243 = vsel %vm987, %v1003, %v1227
        %v1244 = vsel %vm988, %v1004, %v1228
        %v1245 = vsel %vm989, %v1005, %v1229
        %v1246 = vsel %vm990, %v1006, %v1230
        %v1247 = vsel %vm991, %v1007, %v1231
        %v1248 = vsel %vm992, %v1008, %v1232
        %v1249 = vsel %vm993, %v1009, %v1233
        %v1250 = vsel %vm994, %v1010, %v1234
        %v1251 = vsel %vm995, %v1011, %v1235
        %v1252 = vsel %vm996, %v1012, %v1236
        %v1253 = vsel %vm997, %v1013, %v1237
        %v1254 = vsel %vm998, %v1014, %v1238
        %v1255 = vsel %vm999, %v1015, %v1239
        %v1256 = vsub.f32 %v648, %v952
        %v1257 = vsub.f32 %v649, %v953
        %v1258 = vsub.f32 %v650, %v954
        %v1259 = vsub.f32 %v651, %v955
        %v1260 = vsub.f32 %v652, %v956
        %v1261 = vsub.f32 %v653, %v957
        %v1262 = vsub.f32 %v654, %v958
        %v1263 = vsub.f32 %v655, %v959
        %v1264 = vsub.f32 %v656, %v960
        %v1265 = vsub.f32 %v657, %v961
        %v1266 = vsub.f32 %v658, %v962
        %v1267 = vsub.f32 %v659, %v963
        %v1268 = vsub.f32 %v660, %v964
        %v1269 = vsub.f32 %v661, %v965
        %v1270 = vsub.f32 %v662, %v966
        %v1271 = vsub.f32 %v663, %v967
        %v1272 = vsub.f32 0.0, %v1240
        %v1273 = vsub.f32 0.0, %v1241
        %v1274 = vsub.f32 0.0, %v1242
        %v1275 = vsub.f32 0.0, %v1243
        %v1276 = vsub.f32 0.0, %v1244
        %v1277 = vsub.f32 0.0, %v1245
        %v1278 = vsub.f32 0.0, %v1246
        %v1279 = vsub.f32 0.0, %v1247
        %v1280 = vsub.f32 0.0, %v1248
        %v1281 = vsub.f32 0.0, %v1249
        %v1282 = vsub.f32 0.0, %v1250
        %v1283 = vsub.f32 0.0, %v1251
        %v1284 = vsub.f32 0.0, %v1252
        %v1285 = vsub.f32 0.0, %v1253
        %v1286 = vsub.f32 0.0, %v1254
        %v1287 = vsub.f32 0.0, %v1255
        %v1288 = vmul.f32 %v1256, 1.442695
        %v1289 = vpow.pop %v1288
        %v1290 = vmul.f32 %v1257, 1.442695
        %v1291 = vpow.pop %v1290
        %v1292 = vmul.f32 %v1258, 1.442695
        %v1293 = vpow.pop %v1292
        %v1294 = vmul.f32 %v1259, 1.442695
        %v1295 = vpow.pop %v1294
        %v1296 = vmul.f32 %v1260, 1.442695
        %v1297 = vpow.pop %v1296
        %v1298 = vmul.f32 %v1261, 1.442695
        %v1299 = vpow.pop %v1298
        %v1300 = vmul.f32 %v1262, 1.442695
        %v1301 = vpow.pop %v1300
        %v1302 = vmul.f32 %v1263, 1.442695
        %v1303 = vpow.pop %v1302
        %v1304 = vmul.f32 %v1264, 1.442695
        %v1305 = vpow.pop %v1304
        %v1306 = vmul.f32 %v1265, 1.442695
        %v1307 = vpow.pop %v1306
        %v1308 = vmul.f32 %v1266, 1.442695
        %v1309 = vpow.pop %v1308
        %v1310 = vmul.f32 %v1267, 1.442695
        %v1311 = vpow.pop %v1310
        %v1312 = vmul.f32 %v1268, 1.442695
        %v1313 = vpow.pop %v1312
        %v1314 = vmul.f32 %v1269, 1.442695
        %v1315 = vpow.pop %v1314
        %v1316 = vmul.f32 %v1270, 1.442695
        %v1317 = vpow.pop %v1316
        %v1318 = vmul.f32 %v1271, 1.442695
        %v1319 = vpow.pop %v1318
        %v1320 = vsub.f32 %v664, %v1240
        %v1321 = vsub.f32 %v665, %v1241
        %v1322 = vsub.f32 %v666, %v1242
        %v1323 = vsub.f32 %v667, %v1243
        %v1324 = vsub.f32 %v668, %v1244
        %v1325 = vsub.f32 %v669, %v1245
        %v1326 = vsub.f32 %v670, %v1246
        %v1327 = vsub.f32 %v671, %v1247
        %v1328 = vsub.f32 %v672, %v1248
        %v1329 = vsub.f32 %v673, %v1249
        %v1330 = vsub.f32 %v674, %v1250
        %v1331 = vsub.f32 %v675, %v1251
        %v1332 = vsub.f32 %v676, %v1252
        %v1333 = vsub.f32 %v677, %v1253
        %v1334 = vsub.f32 %v678, %v1254
        %v1335 = vsub.f32 %v679, %v1255
        %v1336 = vmul.f32 %v1320, 1.442695
        %v1337 = vpow.pop %v1336
        %v1338 = vmul.f32 %v1321, 1.442695
        %v1339 = vpow.pop %v1338
        %v1340 = vmul.f32 %v1322, 1.442695
        %v1341 = vpow.pop %v1340
        %v1342 = vmul.f32 %v1323, 1.442695
        %v1343 = vpow.pop %v1342
        %v1344 = vmul.f32 %v1324, 1.442695
        %v1345 = vpow.pop %v1344
        %v1346 = vmul.f32 %v1325, 1.442695
        %v1347 = vpow.pop %v1346
        %v1348 = vmul.f32 %v1326, 1.442695
        %v1349 = vpow.pop %v1348
        %v1350 = vmul.f32 %v1327, 1.442695
        %v1351 = vpow.pop %v1350
        %v1352 = vmul.f32 %v1328, 1.442695
        %v1353 = vpow.pop %v1352
        %v1354 = vmul.f32 %v1329, 1.442695
        %v1355 = vpow.pop %v1354
        %v1356 = vmul.f32 %v1330, 1.442695
        %v1357 = vpow.pop %v1356
        %v1358 = vmul.f32 %v1331, 1.442695
        %v1359 = vpow.pop %v1358
        %v1360 = vmul.f32 %v1332, 1.442695
        %v1361 = vpow.pop %v1360
        %v1362 = vmul.f32 %v1333, 1.442695
        %v1363 = vpow.pop %v1362
        %v1364 = vmul.f32 %v1334, 1.442695
        %v1365 = vpow.pop %v1364
        %v1366 = vmul.f32 %v1335, 1.442695
        %v1367 = vpow.pop %v1366
        %v1368 = vsub.f32 %v1289, %v1337
        %v1369 = vsub.f32 %v1291, %v1339
        %v1370 = vsub.f32 %v1293, %v1341
        %v1371 = vsub.f32 %v1295, %v1343
        %v1372 = vsub.f32 %v1297, %v1345
        %v1373 = vsub.f32 %v1299, %v1347
        %v1374 = vsub.f32 %v1301, %v1349
        %v1375 = vsub.f32 %v1303, %v1351
        %v1376 = vsub.f32 %v1305, %v1353
        %v1377 = vsub.f32 %v1307, %v1355
        %v1378 = vsub.f32 %v1309, %v1357
        %v1379 = vsub.f32 %v1311, %v1359
        %v1380 = vsub.f32 %v1313, %v1361
        %v1381 = vsub.f32 %v1315, %v1363
        %v1382 = vsub.f32 %v1317, %v1365
        %v1383 = vsub.f32 %v1319, %v1367
        %v1384 = vsub.f32 %v616, %v514
        %v1385 = vsub.f32 %v617, %v515
        %v1386 = vsub.f32 %v618, %v516
        %v1387 = vsub.f32 %v619, %v517
        %v1388 = vsub.f32 %v620, %v518
        %v1389 = vsub.f32 %v621, %v519
        %v1390 = vsub.f32 %v622, %v520
        %v1391 = vsub.f32 %v623, %v521
        %v1392 = vsub.f32 %v624, %v522
        %v1393 = vsub.f32 %v625, %v523
        %v1394 = vsub.f32 %v626, %v524
        %v1395 = vsub.f32 %v627, %v525
        %v1396 = vsub.f32 %v628, %v526
        %v1397 = vsub.f32 %v629, %v527
        %v1398 = vsub.f32 %v630, %v528
        %v1399 = vsub.f32 %v631, %v529
        %v1400 = vmax.f32 %v616, 0.0
        %v1401 = vmax.f32 %v617, 0.0
        %v1402 = vmax.f32 %v618, 0.0
        %v1403 = vmax.f32 %v619, 0.0
        %v1404 = vmax.f32 %v620, 0.0
        %v1405 = vmax.f32 %v621, 0.0
        %v1406 = vmax.f32 %v622, 0.0
        %v1407 = vmax.f32 %v623, 0.0
        %v1408 = vmax.f32 %v624, 0.0
        %v1409 = vmax.f32 %v625, 0.0
        %v1410 = vmax.f32 %v626, 0.0
        %v1411 = vmax.f32 %v627, 0.0
        %v1412 = vmax.f32 %v628, 0.0
        %v1413 = vmax.f32 %v629, 0.0
        %v1414 = vmax.f32 %v630, 0.0
        %v1415 = vmax.f32 %v631, 0.0
        %vm1416 = vcmp.ne.f32.partialorder %v616, %v616
        %vm1417 = vcmp.ne.f32.partialorder %v617, %v617
        %vm1418 = vcmp.ne.f32.partialorder %v618, %v618
        %vm1419 = vcmp.ne.f32.partialorder %v619, %v619
        %vm1420 = vcmp.ne.f32.partialorder %v620, %v620
        %vm1421 = vcmp.ne.f32.partialorder %v621, %v621
        %vm1422 = vcmp.ne.f32.partialorder %v622, %v622
        %vm1423 = vcmp.ne.f32.partialorder %v623, %v623
        %vm1424 = vcmp.ne.f32.partialorder %v624, %v624
        %vm1425 = vcmp.ne.f32.partialorder %v625, %v625
        %vm1426 = vcmp.ne.f32.partialorder %v626, %v626
        %vm1427 = vcmp.ne.f32.partialorder %v627, %v627
        %vm1428 = vcmp.ne.f32.partialorder %v628, %v628
        %vm1429 = vcmp.ne.f32.partialorder %v629, %v629
        %vm1430 = vcmp.ne.f32.partialorder %v630, %v630
        %vm1431 = vcmp.ne.f32.partialorder %v631, %v631
        %v1432 = vadd.f32 %v616, 0.0
        %v1433 = vadd.f32 %v617, 0.0
        %v1434 = vadd.f32 %v618, 0.0
        %v1435 = vadd.f32 %v619, 0.0
        %v1436 = vadd.f32 %v620, 0.0
        %v1437 = vadd.f32 %v621, 0.0
        %v1438 = vadd.f32 %v622, 0.0
        %v1439 = vadd.f32 %v623, 0.0
        %v1440 = vadd.f32 %v624, 0.0
        %v1441 = vadd.f32 %v625, 0.0
        %v1442 = vadd.f32 %v626, 0.0
        %v1443 = vadd.f32 %v627, 0.0
        %v1444 = vadd.f32 %v628, 0.0
        %v1445 = vadd.f32 %v629, 0.0
        %v1446 = vadd.f32 %v630, 0.0
        %v1447 = vadd.f32 %v631, 0.0
        %v1448 = vand.u32 2147483647, %v616
        %v1449 = vand.u32 2147483647, %v617
        %v1450 = vand.u32 2147483647, %v618
        %v1451 = vand.u32 2147483647, %v619
        %v1452 = vand.u32 2147483647, %v620
        %v1453 = vand.u32 2147483647, %v621
        %v1454 = vand.u32 2147483647, %v622
        %v1455 = vand.u32 2147483647, %v623
        %v1456 = vand.u32 2147483647, %v624
        %v1457 = vand.u32 2147483647, %v625
        %v1458 = vand.u32 2147483647, %v626
        %v1459 = vand.u32 2147483647, %v627
        %v1460 = vand.u32 2147483647, %v628
        %v1461 = vand.u32 2147483647, %v629
        %v1462 = vand.u32 2147483647, %v630
        %v1463 = vand.u32 2147483647, %v631
        %v1464 = vsub.f32 0.0, %v1448
        %v1465 = vsub.f32 0.0, %v1449
        %v1466 = vsub.f32 0.0, %v1450
        %v1467 = vsub.f32 0.0, %v1451
        %v1468 = vsub.f32 0.0, %v1452
        %v1469 = vsub.f32 0.0, %v1453
        %v1470 = vsub.f32 0.0, %v1454
        %v1471 = vsub.f32 0.0, %v1455
        %v1472 = vsub.f32 0.0, %v1456
        %v1473 = vsub.f32 0.0, %v1457
        %v1474 = vsub.f32 0.0, %v1458
        %v1475 = vsub.f32 0.0, %v1459
        %v1476 = vsub.f32 0.0, %v1460
        %v1477 = vsub.f32 0.0, %v1461
        %v1478 = vsub.f32 0.0, %v1462
        %v1479 = vsub.f32 0.0, %v1463
        %v1480 = vmul.f32 %v1464, 1.442695
        %v1481 = vpow.pop %v1480
        %v1482 = vmul.f32 %v1465, 1.442695
        %v1483 = vpow.pop %v1482
        %v1484 = vmul.f32 %v1466, 1.442695
        %v1485 = vpow.pop %v1484
        %v1486 = vmul.f32 %v1467, 1.442695
        %v1487 = vpow.pop %v1486
        %v1488 = vmul.f32 %v1468, 1.442695
        %v1489 = vpow.pop %v1488
        %v1490 = vmul.f32 %v1469, 1.442695
        %v1491 = vpow.pop %v1490
        %v1492 = vmul.f32 %v1470, 1.442695
        %v1493 = vpow.pop %v1492
        %v1494 = vmul.f32 %v1471, 1.442695
        %v1495 = vpow.pop %v1494
        %v1496 = vmul.f32 %v1472, 1.442695
        %v1497 = vpow.pop %v1496
        %v1498 = vmul.f32 %v1473, 1.442695
        %v1499 = vpow.pop %v1498
        %v1500 = vmul.f32 %v1474, 1.442695
        %v1501 = vpow.pop %v1500
        %v1502 = vmul.f32 %v1475, 1.442695
        %v1503 = vpow.pop %v1502
        %v1504 = vmul.f32 %v1476, 1.442695
        %v1505 = vpow.pop %v1504
        %v1506 = vmul.f32 %v1477, 1.442695
        %v1507 = vpow.pop %v1506
        %v1508 = vmul.f32 %v1478, 1.442695
        %v1509 = vpow.pop %v1508
        %v1510 = vmul.f32 %v1479, 1.442695
        %v1511 = vpow.pop %v1510
        %v1512 = vadd.f32 %v1481, 1.0
        %v1513 = vlog2.pop %v1512
        %v1514 = vmul.f32 %v1513, 0.6931472
        %v1515 = vmul.f32 -0.5, %v1481
        %v1516 = vadd.f32 %v1515, 1.0
        %v1517 = vmul.f32 %v1516, %v1481
        %v1518 = vand.u32 2147483647, %v1481
        %vm1519 = vcmp.lt.f32.partialorder %v1518, 0.0004427343
        %v1520 = vsel %vm1519, %v1517, %v1514
        %v1521 = vadd.f32 %v1483, 1.0
        %v1522 = vlog2.pop %v1521
        %v1523 = vmul.f32 %v1522, 0.6931472
        %v1524 = vmul.f32 -0.5, %v1483
        %v1525 = vadd.f32 %v1524, 1.0
        %v1526 = vmul.f32 %v1525, %v1483
        %v1527 = vand.u32 2147483647, %v1483
        %vm1528 = vcmp.lt.f32.partialorder %v1527, 0.0004427343
        %v1529 = vsel %vm1528, %v1526, %v1523
        %v1530 = vadd.f32 %v1485, 1.0
        %v1531 = vlog2.pop %v1530
        %v1532 = vmul.f32 %v1531, 0.6931472
        %v1533 = vmul.f32 -0.5, %v1485
        %v1534 = vadd.f32 %v1533, 1.0
        %v1535 = vmul.f32 %v1534, %v1485
        %v1536 = vand.u32 2147483647, %v1485
        %vm1537 = vcmp.lt.f32.partialorder %v1536, 0.0004427343
        %v1538 = vsel %vm1537, %v1535, %v1532
        %v1539 = vadd.f32 %v1487, 1.0
        %v1540 = vlog2.pop %v1539
        %v1541 = vmul.f32 %v1540, 0.6931472
        %v1542 = vmul.f32 -0.5, %v1487
        %v1543 = vadd.f32 %v1542, 1.0
        %v1544 = vmul.f32 %v1543, %v1487
        %v1545 = vand.u32 2147483647, %v1487
        %vm1546 = vcmp.lt.f32.partialorder %v1545, 0.0004427343
        %v1547 = vsel %vm1546, %v1544, %v1541
        %v1548 = vadd.f32 %v1489, 1.0
        %v1549 = vlog2.pop %v1548
        %v1550 = vmul.f32 %v1549, 0.6931472
        %v1551 = vmul.f32 -0.5, %v1489
        %v1552 = vadd.f32 %v1551, 1.0
        %v1553 = vmul.f32 %v1552, %v1489
        %v1554 = vand.u32 2147483647, %v1489
        %vm1555 = vcmp.lt.f32.partialorder %v1554, 0.0004427343
        %v1556 = vsel %vm1555, %v1553, %v1550
        %v1557 = vadd.f32 %v1491, 1.0
        %v1558 = vlog2.pop %v1557
        %v1559 = vmul.f32 %v1558, 0.6931472
        %v1560 = vmul.f32 -0.5, %v1491
        %v1561 = vadd.f32 %v1560, 1.0
        %v1562 = vmul.f32 %v1561, %v1491
        %v1563 = vand.u32 2147483647, %v1491
        %vm1564 = vcmp.lt.f32.partialorder %v1563, 0.0004427343
        %v1565 = vsel %vm1564, %v1562, %v1559
        %v1566 = vadd.f32 %v1493, 1.0
        %v1567 = vlog2.pop %v1566
        %v1568 = vmul.f32 %v1567, 0.6931472
        %v1569 = vmul.f32 -0.5, %v1493
        %v1570 = vadd.f32 %v1569, 1.0
        %v1571 = vmul.f32 %v1570, %v1493
        %v1572 = vand.u32 2147483647, %v1493
        %vm1573 = vcmp.lt.f32.partialorder %v1572, 0.0004427343
        %v1574 = vsel %vm1573, %v1571, %v1568
        %v1575 = vadd.f32 %v1495, 1.0
        %v1576 = vlog2.pop %v1575
        %v1577 = vmul.f32 %v1576, 0.6931472
        %v1578 = vmul.f32 -0.5, %v1495
        %v1579 = vadd.f32 %v1578, 1.0
        %v1580 = vmul.f32 %v1579, %v1495
        %v1581 = vand.u32 2147483647, %v1495
        %vm1582 = vcmp.lt.f32.partialorder %v1581, 0.0004427343
        %v1583 = vsel %vm1582, %v1580, %v1577
        %v1584 = vadd.f32 %v1497, 1.0
        %v1585 = vlog2.pop %v1584
        %v1586 = vmul.f32 %v1585, 0.6931472
        %v1587 = vmul.f32 -0.5, %v1497
        %v1588 = vadd.f32 %v1587, 1.0
        %v1589 = vmul.f32 %v1588, %v1497
        %v1590 = vand.u32 2147483647, %v1497
        %vm1591 = vcmp.lt.f32.partialorder %v1590, 0.0004427343
        %v1592 = vsel %vm1591, %v1589, %v1586
        %v1593 = vadd.f32 %v1499, 1.0
        %v1594 = vlog2.pop %v1593
        %v1595 = vmul.f32 %v1594, 0.6931472
        %v1596 = vmul.f32 -0.5, %v1499
        %v1597 = vadd.f32 %v1596, 1.0
        %v1598 = vmul.f32 %v1597, %v1499
        %v1599 = vand.u32 2147483647, %v1499
        %vm1600 = vcmp.lt.f32.partialorder %v1599, 0.0004427343
        %v1601 = vsel %vm1600, %v1598, %v1595
        %v1602 = vadd.f32 %v1501, 1.0
        %v1603 = vlog2.pop %v1602
        %v1604 = vmul.f32 %v1603, 0.6931472
        %v1605 = vmul.f32 -0.5, %v1501
        %v1606 = vadd.f32 %v1605, 1.0
        %v1607 = vmul.f32 %v1606, %v1501
        %v1608 = vand.u32 2147483647, %v1501
        %vm1609 = vcmp.lt.f32.partialorder %v1608, 0.0004427343
        %v1610 = vsel %vm1609, %v1607, %v1604
        %v1611 = vadd.f32 %v1503, 1.0
        %v1612 = vlog2.pop %v1611
        %v1613 = vmul.f32 %v1612, 0.6931472
        %v1614 = vmul.f32 -0.5, %v1503
        %v1615 = vadd.f32 %v1614, 1.0
        %v1616 = vmul.f32 %v1615, %v1503
        %v1617 = vand.u32 2147483647, %v1503
        %vm1618 = vcmp.lt.f32.partialorder %v1617, 0.0004427343
        %v1619 = vsel %vm1618, %v1616, %v1613
        %v1620 = vadd.f32 %v1505, 1.0
        %v1621 = vlog2.pop %v1620
        %v1622 = vmul.f32 %v1621, 0.6931472
        %v1623 = vmul.f32 -0.5, %v1505
        %v1624 = vadd.f32 %v1623, 1.0
        %v1625 = vmul.f32 %v1624, %v1505
        %v1626 = vand.u32 2147483647, %v1505
        %vm1627 = vcmp.lt.f32.partialorder %v1626, 0.0004427343
        %v1628 = vsel %vm1627, %v1625, %v1622
        %v1629 = vadd.f32 %v1507, 1.0
        %v1630 = vlog2.pop %v1629
        %v1631 = vmul.f32 %v1630, 0.6931472
        %v1632 = vmul.f32 -0.5, %v1507
        %v1633 = vadd.f32 %v1632, 1.0
        %v1634 = vmul.f32 %v1633, %v1507
        %v1635 = vand.u32 2147483647, %v1507
        %vm1636 = vcmp.lt.f32.partialorder %v1635, 0.0004427343
        %v1637 = vsel %vm1636, %v1634, %v1631
        %v1638 = vadd.f32 %v1509, 1.0
        %v1639 = vlog2.pop %v1638
        %v1640 = vmul.f32 %v1639, 0.6931472
        %v1641 = vmul.f32 -0.5, %v1509
        %v1642 = vadd.f32 %v1641, 1.0
        %v1643 = vmul.f32 %v1642, %v1509
        %v1644 = vand.u32 2147483647, %v1509
        %vm1645 = vcmp.lt.f32.partialorder %v1644, 0.0004427343
        %v1646 = vsel %vm1645, %v1643, %v1640
        %v1647 = vadd.f32 %v1511, 1.0
        %v1648 = vlog2.pop %v1647
        %v1649 = vmul.f32 %v1648, 0.6931472
        %v1650 = vmul.f32 -0.5, %v1511
        %v1651 = vadd.f32 %v1650, 1.0
        %v1652 = vmul.f32 %v1651, %v1511
        %v1653 = vand.u32 2147483647, %v1511
        %vm1654 = vcmp.lt.f32.partialorder %v1653, 0.0004427343
        %v1655 = vsel %vm1654, %v1652, %v1649
        %v1656 = vadd.f32 %v1400, %v1520
        %v1657 = vadd.f32 %v1401, %v1529
        %v1658 = vadd.f32 %v1402, %v1538
        %v1659 = vadd.f32 %v1403, %v1547
        %v1660 = vadd.f32 %v1404, %v1556
        %v1661 = vadd.f32 %v1405, %v1565
        %v1662 = vadd.f32 %v1406, %v1574
        %v1663 = vadd.f32 %v1407, %v1583
        %v1664 = vadd.f32 %v1408, %v1592
        %v1665 = vadd.f32 %v1409, %v1601
        %v1666 = vadd.f32 %v1410, %v1610
        %v1667 = vadd.f32 %v1411, %v1619
        %v1668 = vadd.f32 %v1412, %v1628
        %v1669 = vadd.f32 %v1413, %v1637
        %v1670 = vadd.f32 %v1414, %v1646
        %v1671 = vadd.f32 %v1415, %v1655
        %v1672 = vsel %vm1416, %v1432, %v1656
        %v1673 = vsel %vm1417, %v1433, %v1657
        %v1674 = vsel %vm1418, %v1434, %v1658
        %v1675 = vsel %vm1419, %v1435, %v1659
        %v1676 = vsel %vm1420, %v1436, %v1660
        %v1677 = vsel %vm1421, %v1437, %v1661
        %v1678 = vsel %vm1422, %v1438, %v1662
        %v1679 = vsel %vm1423, %v1439, %v1663
        %v1680 = vsel %vm1424, %v1440, %v1664
        %v1681 = vsel %vm1425, %v1441, %v1665
        %v1682 = vsel %vm1426, %v1442, %v1666
        %v1683 = vsel %vm1427, %v1443, %v1667
        %v1684 = vsel %vm1428, %v1444, %v1668
        %v1685 = vsel %vm1429, %v1445, %v1669
        %v1686 = vsel %vm1430, %v1446, %v1670
        %v1687 = vsel %vm1431, %v1447, %v1671
        %v1688 = vmul.f32 %v1672, 2.0
        %v1689 = vmul.f32 %v1673, 2.0
        %v1690 = vmul.f32 %v1674, 2.0
        %v1691 = vmul.f32 %v1675, 2.0
        %v1692 = vmul.f32 %v1676, 2.0
        %v1693 = vmul.f32 %v1677, 2.0
        %v1694 = vmul.f32 %v1678, 2.0
        %v1695 = vmul.f32 %v1679, 2.0
        %v1696 = vmul.f32 %v1680, 2.0
        %v1697 = vmul.f32 %v1681, 2.0
        %v1698 = vmul.f32 %v1682, 2.0
        %v1699 = vmul.f32 %v1683, 2.0
        %v1700 = vmul.f32 %v1684, 2.0
        %v1701 = vmul.f32 %v1685, 2.0
        %v1702 = vmul.f32 %v1686, 2.0
        %v1703 = vmul.f32 %v1687, 2.0
        %v1704 = vsub.f32 %v1384, %v1688
        %v1705 = vsub.f32 %v1385, %v1689
        %v1706 = vsub.f32 %v1386, %v1690
        %v1707 = vsub.f32 %v1387, %v1691
        %v1708 = vsub.f32 %v1388, %v1692
        %v1709 = vsub.f32 %v1389, %v1693
        %v1710 = vsub.f32 %v1390, %v1694
        %v1711 = vsub.f32 %v1391, %v1695
        %v1712 = vsub.f32 %v1392, %v1696
        %v1713 = vsub.f32 %v1393, %v1697
        %v1714 = vsub.f32 %v1394, %v1698
        %v1715 = vsub.f32 %v1395, %v1699
        %v1716 = vsub.f32 %v1396, %v1700
        %v1717 = vsub.f32 %v1397, %v1701
        %v1718 = vsub.f32 %v1398, %v1702
        %v1719 = vsub.f32 %v1399, %v1703
        %vm1720 = vcmp.gt.f32.partialorder %v1368, 1e-05
        %vm1721 = vcmp.gt.f32.partialorder %v1369, 1e-05
        %vm1722 = vcmp.gt.f32.partialorder %v1370, 1e-05
        %vm1723 = vcmp.gt.f32.partialorder %v1371, 1e-05
        %vm1724 = vcmp.gt.f32.partialorder %v1372, 1e-05
        %vm1725 = vcmp.gt.f32.partialorder %v1373, 1e-05
        %vm1726 = vcmp.gt.f32.partialorder %v1374, 1e-05
        %vm1727 = vcmp.gt.f32.partialorder %v1375, 1e-05
        %vm1728 = vcmp.gt.f32.partialorder %v1376, 1e-05
        %vm1729 = vcmp.gt.f32.partialorder %v1377, 1e-05
        %vm1730 = vcmp.gt.f32.partialorder %v1378, 1e-05
        %vm1731 = vcmp.gt.f32.partialorder %v1379, 1e-05
        %vm1732 = vcmp.gt.f32.partialorder %v1380, 1e-05
        %vm1733 = vcmp.gt.f32.partialorder %v1381, 1e-05
        %vm1734 = vcmp.gt.f32.partialorder %v1382, 1e-05
        %vm1735 = vcmp.gt.f32.partialorder %v1383, 1e-05
        %v1736 = vmax.f32 %v1368, 1e-12
        %v1737 = vmax.f32 %v1369, 1e-12
        %v1738 = vmax.f32 %v1370, 1e-12
        %v1739 = vmax.f32 %v1371, 1e-12
        %v1740 = vmax.f32 %v1372, 1e-12
        %v1741 = vmax.f32 %v1373, 1e-12
        %v1742 = vmax.f32 %v1374, 1e-12
        %v1743 = vmax.f32 %v1375, 1e-12
        %v1744 = vmax.f32 %v1376, 1e-12
        %v1745 = vmax.f32 %v1377, 1e-12
        %v1746 = vmax.f32 %v1378, 1e-12
        %v1747 = vmax.f32 %v1379, 1e-12
        %v1748 = vmax.f32 %v1380, 1e-12
        %v1749 = vmax.f32 %v1381, 1e-12
        %v1750 = vmax.f32 %v1382, 1e-12
        %v1751 = vmax.f32 %v1383, 1e-12
        %v1752 = vlog2.pop %v1736
        %v1753 = vmul.f32 %v1752, 0.6931472
        %v1754 = vlog2.pop %v1737
        %v1755 = vmul.f32 %v1754, 0.6931472
        %v1756 = vlog2.pop %v1738
        %v1757 = vmul.f32 %v1756, 0.6931472
        %v1758 = vlog2.pop %v1739
        %v1759 = vmul.f32 %v1758, 0.6931472
        %v1760 = vlog2.pop %v1740
        %v1761 = vmul.f32 %v1760, 0.6931472
        %v1762 = vlog2.pop %v1741
        %v1763 = vmul.f32 %v1762, 0.6931472
        %v1764 = vlog2.pop %v1742
        %v1765 = vmul.f32 %v1764, 0.6931472
        %v1766 = vlog2.pop %v1743
        %v1767 = vmul.f32 %v1766, 0.6931472
        %v1768 = vlog2.pop %v1744
        %v1769 = vmul.f32 %v1768, 0.6931472
        %v1770 = vlog2.pop %v1745
        %v1771 = vmul.f32 %v1770, 0.6931472
        %v1772 = vlog2.pop %v1746
        %v1773 = vmul.f32 %v1772, 0.6931472
        %v1774 = vlog2.pop %v1747
        %v1775 = vmul.f32 %v1774, 0.6931472
        %v1776 = vlog2.pop %v1748
        %v1777 = vmul.f32 %v1776, 0.6931472
        %v1778 = vlog2.pop %v1749
        %v1779 = vmul.f32 %v1778, 0.6931472
        %v1780 = vlog2.pop %v1750
        %v1781 = vmul.f32 %v1780, 0.6931472
        %v1782 = vlog2.pop %v1751
        %v1783 = vmul.f32 %v1782, 0.6931472
        %v1784 = vsub.f32 %v1704, 4.8481164
        %v1785 = vsub.f32 %v1705, 4.8481164
        %v1786 = vsub.f32 %v1706, 4.8481164
        %v1787 = vsub.f32 %v1707, 4.8481164
        %v1788 = vsub.f32 %v1708, 4.8481164
        %v1789 = vsub.f32 %v1709, 4.8481164
        %v1790 = vsub.f32 %v1710, 4.8481164
        %v1791 = vsub.f32 %v1711, 4.8481164
        %v1792 = vsub.f32 %v1712, 4.8481164
        %v1793 = vsub.f32 %v1713, 4.8481164
        %v1794 = vsub.f32 %v1714, 4.8481164
        %v1795 = vsub.f32 %v1715, 4.8481164
        %v1796 = vsub.f32 %v1716, 4.8481164
        %v1797 = vsub.f32 %v1717, 4.8481164
        %v1798 = vsub.f32 %v1718, 4.8481164
        %v1799 = vsub.f32 %v1719, 4.8481164
        %v1800 = vsel %vm1720, %v1753, %v1784
        %v1801 = vsel %vm1721, %v1755, %v1785
        %v1802 = vsel %vm1722, %v1757, %v1786
        %v1803 = vsel %vm1723, %v1759, %v1787
        %v1804 = vsel %vm1724, %v1761, %v1788
        %v1805 = vsel %vm1725, %v1763, %v1789
        %v1806 = vsel %vm1726, %v1765, %v1790
        %v1807 = vsel %vm1727, %v1767, %v1791
        %v1808 = vsel %vm1728, %v1769, %v1792
        %v1809 = vsel %vm1729, %v1771, %v1793
        %v1810 = vsel %vm1730, %v1773, %v1794
        %v1811 = vsel %vm1731, %v1775, %v1795
        %v1812 = vsel %vm1732, %v1777, %v1796
        %v1813 = vsel %vm1733, %v1779, %v1797
        %v1814 = vsel %vm1734, %v1781, %v1798
        %v1815 = vsel %vm1735, %v1783, %v1799
        %vm1816 = vcmp.gt.f32.partialorder %v530, 0.999
        %vm1817 = vcmp.gt.f32.partialorder %v531, 0.999
        %v1818 = vsel %vm1816, 1, 0
        %v1819 = vsel %vm1817, 1, 0
        %v1820 = vperm.slane %v1818, 0
        %v1821 = vperm.slane %v1818, 1
        %v1822 = vperm.slane %v1818, 2
        %v1823 = vperm.slane %v1818, 3
        %v1824 = vperm.slane %v1819, 0
        %v1825 = vperm.slane %v1819, 1
        %v1826 = vperm.slane %v1819, 2
        %v1827 = vperm.slane %v1819, 3
        %vm1828 = vcmp.eq.s32.totalorder %v1820, 1
        %vm1829 = vcmp.eq.s32.totalorder %v1821, 1
        %vm1830 = vcmp.eq.s32.totalorder %v1822, 1
        %vm1831 = vcmp.eq.s32.totalorder %v1823, 1
        %vm1832 = vcmp.eq.s32.totalorder %v1824, 1
        %vm1833 = vcmp.eq.s32.totalorder %v1825, 1
        %vm1834 = vcmp.eq.s32.totalorder %v1826, 1
        %vm1835 = vcmp.eq.s32.totalorder %v1827, 1
        %v1836 = vsel %vm1828, %v1272, %v1800
        %v1837 = vsel %vm1829, %v1273, %v1801
        %v1838 = vsel %vm1830, %v1274, %v1802
        %v1839 = vsel %vm1831, %v1275, %v1803
        %v1840 = vsel %vm1828, %v1276, %v1804
        %v1841 = vsel %vm1829, %v1277, %v1805
        %v1842 = vsel %vm1830, %v1278, %v1806
        %v1843 = vsel %vm1831, %v1279, %v1807
        %v1844 = vsel %vm1832, %v1280, %v1808
        %v1845 = vsel %vm1833, %v1281, %v1809
        %v1846 = vsel %vm1834, %v1282, %v1810
        %v1847 = vsel %vm1835, %v1283, %v1811
        %v1848 = vsel %vm1832, %v1284, %v1812
        %v1849 = vsel %vm1833, %v1285, %v1813
        %v1850 = vsel %vm1834, %v1286, %v1814
        %v1851 = vsel %vm1835, %v1287, %v1815
        %vm1852 = vcmp.lt.f32.partialorder %v530, -0.999
        %vm1853 = vcmp.lt.f32.partialorder %v531, -0.999
        %v1854 = vsel %vm1852, 1, 0
        %v1855 = vsel %vm1853, 1, 0
        %v1856 = vperm.slane %v1854, 0
        %v1857 = vperm.slane %v1854, 1
        %v1858 = vperm.slane %v1854, 2
        %v1859 = vperm.slane %v1854, 3
        %v1860 = vperm.slane %v1855, 0
        %v1861 = vperm.slane %v1855, 1
        %v1862 = vperm.slane %v1855, 2
        %v1863 = vperm.slane %v1855, 3
        %vm1864 = vcmp.eq.s32.totalorder %v1856, 1
        %vm1865 = vcmp.eq.s32.totalorder %v1857, 1
        %vm1866 = vcmp.eq.s32.totalorder %v1858, 1
        %vm1867 = vcmp.eq.s32.totalorder %v1859, 1
        %vm1868 = vcmp.eq.s32.totalorder %v1860, 1
        %vm1869 = vcmp.eq.s32.totalorder %v1861, 1
        %vm1870 = vcmp.eq.s32.totalorder %v1862, 1
        %vm1871 = vcmp.eq.s32.totalorder %v1863, 1
        %v1872 = vsel %vm1864, %v1256, %v1836
        %v1873 = vsel %vm1865, %v1257, %v1837
        %v1874 = vsel %vm1866, %v1258, %v1838
        %v1875 = vsel %vm1867, %v1259, %v1839
        %v1876 = vsel %vm1864, %v1260, %v1840
        %v1877 = vsel %vm1865, %v1261, %v1841
        %v1878 = vsel %vm1866, %v1262, %v1842
        %v1879 = vsel %vm1867, %v1263, %v1843
        %v1880 = vsel %vm1868, %v1264, %v1844
        %v1881 = vsel %vm1869, %v1265, %v1845
        %v1882 = vsel %vm1870, %v1266, %v1846
        %v1883 = vsel %vm1871, %v1267, %v1847
        %v1884 = vsel %vm1868, %v1268, %v1848
        %v1885 = vsel %vm1869, %v1269, %v1849
        %v1886 = vsel %vm1870, %v1270, %v1850
        %v1887 = vsel %vm1871, %v1271, %v1851
        %v1888 = vadd.f32 %v1872, %v466
        %v1889 = vadd.f32 %v1873, %v467
        %v1890 = vadd.f32 %v1874, %v468
        %v1891 = vadd.f32 %v1875, %v469
        %v1892 = vadd.f32 %v1876, %v470
        %v1893 = vadd.f32 %v1877, %v471
        %v1894 = vadd.f32 %v1878, %v472
        %v1895 = vadd.f32 %v1879, %v473
        %v1896 = vadd.f32 %v1880, %v490
        %v1897 = vadd.f32 %v1881, %v491
        %v1898 = vadd.f32 %v1882, %v492
        %v1899 = vadd.f32 %v1883, %v493
        %v1900 = vadd.f32 %v1884, %v494
        %v1901 = vadd.f32 %v1885, %v495
        %v1902 = vadd.f32 %v1886, %v496
        %v1903 = vadd.f32 %v1887, %v497
        %vm1904 = vcmask 1041408
        %v1905 = vsel %vm1904, %v1892, -inf
        %v1906 = vmax.f32 %v1888, %v1905
        %v1907 = vrot.slane %v1906, 4
        %v1908 = vmax.f32 %v1906, %v1907
        %v1909 = vrot.slane %v1908, 2
        %v1910 = vmax.f32 %v1908, %v1909
        %v1911 = vrot.slane %v1910, 1
        %v1912 = vmax.f32 %v1910, %v1911
        %v1913 = vsel %vm1904, %v1893, -inf
        %v1914 = vmax.f32 %v1889, %v1913
        %v1915 = vrot.slane %v1914, 4
        %v1916 = vmax.f32 %v1914, %v1915
        %v1917 = vrot.slane %v1916, 2
        %v1918 = vmax.f32 %v1916, %v1917
        %v1919 = vrot.slane %v1918, 1
        %v1920 = vmax.f32 %v1918, %v1919
        %v1921 = vsel %vm1904, %v1894, -inf
        %v1922 = vmax.f32 %v1890, %v1921
        %v1923 = vrot.slane %v1922, 4
        %v1924 = vmax.f32 %v1922, %v1923
        %v1925 = vrot.slane %v1924, 2
        %v1926 = vmax.f32 %v1924, %v1925
        %v1927 = vrot.slane %v1926, 1
        %v1928 = vmax.f32 %v1926, %v1927
        %v1929 = vsel %vm1904, %v1895, -inf
        %v1930 = vmax.f32 %v1891, %v1929
        %v1931 = vrot.slane %v1930, 4
        %v1932 = vmax.f32 %v1930, %v1931
        %v1933 = vrot.slane %v1932, 2
        %v1934 = vmax.f32 %v1932, %v1933
        %v1935 = vrot.slane %v1934, 1
        %v1936 = vmax.f32 %v1934, %v1935
        %v1937 = vsel %vm1904, %v1900, -inf
        %v1938 = vmax.f32 %v1896, %v1937
        %v1939 = vrot.slane %v1938, 4
        %v1940 = vmax.f32 %v1938, %v1939
        %v1941 = vrot.slane %v1940, 2
        %v1942 = vmax.f32 %v1940, %v1941
        %v1943 = vrot.slane %v1942, 1
        %v1944 = vmax.f32 %v1942, %v1943
        %v1945 = vsel %vm1904, %v1901, -inf
        %v1946 = vmax.f32 %v1897, %v1945
        %v1947 = vrot.slane %v1946, 4
        %v1948 = vmax.f32 %v1946, %v1947
        %v1949 = vrot.slane %v1948, 2
        %v1950 = vmax.f32 %v1948, %v1949
        %v1951 = vrot.slane %v1950, 1
        %v1952 = vmax.f32 %v1950, %v1951
        %v1953 = vsel %vm1904, %v1902, -inf
        %v1954 = vmax.f32 %v1898, %v1953
        %v1955 = vrot.slane %v1954, 4
        %v1956 = vmax.f32 %v1954, %v1955
        %v1957 = vrot.slane %v1956, 2
        %v1958 = vmax.f32 %v1956, %v1957
        %v1959 = vrot.slane %v1958, 1
        %v1960 = vmax.f32 %v1958, %v1959
        %v1961 = vsel %vm1904, %v1903, -inf
        %v1962 = vmax.f32 %v1899, %v1961
        %v1963 = vrot.slane %v1962, 4
        %v1964 = vmax.f32 %v1962, %v1963
        %v1965 = vrot.slane %v1964, 2
        %v1966 = vmax.f32 %v1964, %v1965
        %v1967 = vrot.slane %v1966, 1
        %v1968 = vmax.f32 %v1966, %v1967
        %v1969 = vsub.f32 %v1888, %v1912
        %v1970 = vsub.f32 %v1889, %v1920
        %v1971 = vsub.f32 %v1890, %v1928
        %v1972 = vsub.f32 %v1891, %v1936
        %v1973 = vsub.f32 %v1892, %v1912
        %v1974 = vsub.f32 %v1893, %v1920
        %v1975 = vsub.f32 %v1894, %v1928
        %v1976 = vsub.f32 %v1895, %v1936
        %v1977 = vsub.f32 %v1896, %v1944
        %v1978 = vsub.f32 %v1897, %v1952
        %v1979 = vsub.f32 %v1898, %v1960
        %v1980 = vsub.f32 %v1899, %v1968
        %v1981 = vsub.f32 %v1900, %v1944
        %v1982 = vsub.f32 %v1901, %v1952
        %v1983 = vsub.f32 %v1902, %v1960
        %v1984 = vsub.f32 %v1903, %v1968
        %v1985 = vmul.f32 %v1969, 1.442695
        %v1986 = vpow.pop %v1985
        %v1987 = vmul.f32 %v1970, 1.442695
        %v1988 = vpow.pop %v1987
        %v1989 = vmul.f32 %v1971, 1.442695
        %v1990 = vpow.pop %v1989
        %v1991 = vmul.f32 %v1972, 1.442695
        %v1992 = vpow.pop %v1991
        %v1993 = vmul.f32 %v1973, 1.442695
        %v1994 = vpow.pop %v1993
        %v1995 = vmul.f32 %v1974, 1.442695
        %v1996 = vpow.pop %v1995
        %v1997 = vmul.f32 %v1975, 1.442695
        %v1998 = vpow.pop %v1997
        %v1999 = vmul.f32 %v1976, 1.442695
        %v2000 = vpow.pop %v1999
        %v2001 = vmul.f32 %v1977, 1.442695
        %v2002 = vpow.pop %v2001
        %v2003 = vmul.f32 %v1978, 1.442695
        %v2004 = vpow.pop %v2003
        %v2005 = vmul.f32 %v1979, 1.442695
        %v2006 = vpow.pop %v2005
        %v2007 = vmul.f32 %v1980, 1.442695
        %v2008 = vpow.pop %v2007
        %v2009 = vmul.f32 %v1981, 1.442695
        %v2010 = vpow.pop %v2009
        %v2011 = vmul.f32 %v1982, 1.442695
        %v2012 = vpow.pop %v2011
        %v2013 = vmul.f32 %v1983, 1.442695
        %v2014 = vpow.pop %v2013
        %v2015 = vmul.f32 %v1984, 1.442695
        %v2016 = vpow.pop %v2015
        %v2017 = vsel %vm1904, %v1994, 0.0
        %v2018 = vadd.f32 %v1986, %v2017
        %v2019 = vrot.slane %v2018, 4
        %v2020 = vadd.f32 %v2018, %v2019
        %v2021 = vrot.slane %v2020, 2
        %v2022 = vadd.f32 %v2020, %v2021
        %v2023 = vrot.slane %v2022, 1
        %v2024 = vadd.f32 %v2022, %v2023
        %v2025 = vsel %vm1904, %v1996, 0.0
        %v2026 = vadd.f32 %v1988, %v2025
        %v2027 = vrot.slane %v2026, 4
        %v2028 = vadd.f32 %v2026, %v2027
        %v2029 = vrot.slane %v2028, 2
        %v2030 = vadd.f32 %v2028, %v2029
        %v2031 = vrot.slane %v2030, 1
        %v2032 = vadd.f32 %v2030, %v2031
        %v2033 = vsel %vm1904, %v1998, 0.0
        %v2034 = vadd.f32 %v1990, %v2033
        %v2035 = vrot.slane %v2034, 4
        %v2036 = vadd.f32 %v2034, %v2035
        %v2037 = vrot.slane %v2036, 2
        %v2038 = vadd.f32 %v2036, %v2037
        %v2039 = vrot.slane %v2038, 1
        %v2040 = vadd.f32 %v2038, %v2039
        %v2041 = vsel %vm1904, %v2000, 0.0
        %v2042 = vadd.f32 %v1992, %v2041
        %v2043 = vrot.slane %v2042, 4
        %v2044 = vadd.f32 %v2042, %v2043
        %v2045 = vrot.slane %v2044, 2
        %v2046 = vadd.f32 %v2044, %v2045
        %v2047 = vrot.slane %v2046, 1
        %v2048 = vadd.f32 %v2046, %v2047
        %v2049 = vsel %vm1904, %v2010, 0.0
        %v2050 = vadd.f32 %v2002, %v2049
        %v2051 = vrot.slane %v2050, 4
        %v2052 = vadd.f32 %v2050, %v2051
        %v2053 = vrot.slane %v2052, 2
        %v2054 = vadd.f32 %v2052, %v2053
        %v2055 = vrot.slane %v2054, 1
        %v2056 = vadd.f32 %v2054, %v2055
        %v2057 = vsel %vm1904, %v2012, 0.0
        %v2058 = vadd.f32 %v2004, %v2057
        %v2059 = vrot.slane %v2058, 4
        %v2060 = vadd.f32 %v2058, %v2059
        %v2061 = vrot.slane %v2060, 2
        %v2062 = vadd.f32 %v2060, %v2061
        %v2063 = vrot.slane %v2062, 1
        %v2064 = vadd.f32 %v2062, %v2063
        %v2065 = vsel %vm1904, %v2014, 0.0
        %v2066 = vadd.f32 %v2006, %v2065
        %v2067 = vrot.slane %v2066, 4
        %v2068 = vadd.f32 %v2066, %v2067
        %v2069 = vrot.slane %v2068, 2
        %v2070 = vadd.f32 %v2068, %v2069
        %v2071 = vrot.slane %v2070, 1
        %v2072 = vadd.f32 %v2070, %v2071
        %v2073 = vsel %vm1904, %v2016, 0.0
        %v2074 = vadd.f32 %v2008, %v2073
        %v2075 = vrot.slane %v2074, 4
        %v2076 = vadd.f32 %v2074, %v2075
        %v2077 = vrot.slane %v2076, 2
        %v2078 = vadd.f32 %v2076, %v2077
        %v2079 = vrot.slane %v2078, 1
        %v2080 = vadd.f32 %v2078, %v2079
        %v2081 = vlog2.pop %v2024
        %v2082 = vmul.f32 %v2081, 0.6931472
        %v2083 = vlog2.pop %v2032
        %v2084 = vmul.f32 %v2083, 0.6931472
        %v2085 = vlog2.pop %v2040
        %v2086 = vmul.f32 %v2085, 0.6931472
        %v2087 = vlog2.pop %v2048
        %v2088 = vmul.f32 %v2087, 0.6931472
        %v2089 = vlog2.pop %v2056
        %v2090 = vmul.f32 %v2089, 0.6931472
        %v2091 = vlog2.pop %v2064
        %v2092 = vmul.f32 %v2091, 0.6931472
        %v2093 = vlog2.pop %v2072
        %v2094 = vmul.f32 %v2093, 0.6931472
        %v2095 = vlog2.pop %v2080
        %v2096 = vmul.f32 %v2095, 0.6931472
        %v2097 = vadd.f32 %v2082, %v1912
        %v2098 = vadd.f32 %v2084, %v1920
        %v2099 = vadd.f32 %v2086, %v1928
        %v2100 = vadd.f32 %v2088, %v1936
        %v2101 = vadd.f32 %v2090, %v1944
        %v2102 = vadd.f32 %v2092, %v1952
        %v2103 = vadd.f32 %v2094, %v1960
        %v2104 = vadd.f32 %v2096, %v1968
        %v2105 = vsel %vm1904, %v470, -inf
        %v2106 = vmax.f32 %v466, %v2105
        %v2107 = vrot.slane %v2106, 4
        %v2108 = vmax.f32 %v2106, %v2107
        %v2109 = vrot.slane %v2108, 2
        %v2110 = vmax.f32 %v2108, %v2109
        %v2111 = vrot.slane %v2110, 1
        %v2112 = vmax.f32 %v2110, %v2111
        %v2113 = vsel %vm1904, %v471, -inf
        %v2114 = vmax.f32 %v467, %v2113
        %v2115 = vrot.slane %v2114, 4
        %v2116 = vmax.f32 %v2114, %v2115
        %v2117 = vrot.slane %v2116, 2
        %v2118 = vmax.f32 %v2116, %v2117
        %v2119 = vrot.slane %v2118, 1
        %v2120 = vmax.f32 %v2118, %v2119
        %v2121 = vsel %vm1904, %v472, -inf
        %v2122 = vmax.f32 %v468, %v2121
        %v2123 = vrot.slane %v2122, 4
        %v2124 = vmax.f32 %v2122, %v2123
        %v2125 = vrot.slane %v2124, 2
        %v2126 = vmax.f32 %v2124, %v2125
        %v2127 = vrot.slane %v2126, 1
        %v2128 = vmax.f32 %v2126, %v2127
        %v2129 = vsel %vm1904, %v473, -inf
        %v2130 = vmax.f32 %v469, %v2129
        %v2131 = vrot.slane %v2130, 4
        %v2132 = vmax.f32 %v2130, %v2131
        %v2133 = vrot.slane %v2132, 2
        %v2134 = vmax.f32 %v2132, %v2133
        %v2135 = vrot.slane %v2134, 1
        %v2136 = vmax.f32 %v2134, %v2135
        %v2137 = vsel %vm1904, %v494, -inf
        %v2138 = vmax.f32 %v490, %v2137
        %v2139 = vrot.slane %v2138, 4
        %v2140 = vmax.f32 %v2138, %v2139
        %v2141 = vrot.slane %v2140, 2
        %v2142 = vmax.f32 %v2140, %v2141
        %v2143 = vrot.slane %v2142, 1
        %v2144 = vmax.f32 %v2142, %v2143
        %v2145 = vsel %vm1904, %v495, -inf
        %v2146 = vmax.f32 %v491, %v2145
        %v2147 = vrot.slane %v2146, 4
        %v2148 = vmax.f32 %v2146, %v2147
        %v2149 = vrot.slane %v2148, 2
        %v2150 = vmax.f32 %v2148, %v2149
        %v2151 = vrot.slane %v2150, 1
        %v2152 = vmax.f32 %v2150, %v2151
        %v2153 = vsel %vm1904, %v496, -inf
        %v2154 = vmax.f32 %v492, %v2153
        %v2155 = vrot.slane %v2154, 4
        %v2156 = vmax.f32 %v2154, %v2155
        %v2157 = vrot.slane %v2156, 2
        %v2158 = vmax.f32 %v2156, %v2157
        %v2159 = vrot.slane %v2158, 1
        %v2160 = vmax.f32 %v2158, %v2159
        %v2161 = vsel %vm1904, %v497, -inf
        %v2162 = vmax.f32 %v493, %v2161
        %v2163 = vrot.slane %v2162, 4
        %v2164 = vmax.f32 %v2162, %v2163
        %v2165 = vrot.slane %v2164, 2
        %v2166 = vmax.f32 %v2164, %v2165
        %v2167 = vrot.slane %v2166, 1
        %v2168 = vmax.f32 %v2166, %v2167
        %v2169 = vsub.f32 %v466, %v2112
        %v2170 = vsub.f32 %v467, %v2120
        %v2171 = vsub.f32 %v468, %v2128
        %v2172 = vsub.f32 %v469, %v2136
        %v2173 = vsub.f32 %v470, %v2112
        %v2174 = vsub.f32 %v471, %v2120
        %v2175 = vsub.f32 %v472, %v2128
        %v2176 = vsub.f32 %v473, %v2136
        %v2177 = vsub.f32 %v490, %v2144
        %v2178 = vsub.f32 %v491, %v2152
        %v2179 = vsub.f32 %v492, %v2160
        %v2180 = vsub.f32 %v493, %v2168
        %v2181 = vsub.f32 %v494, %v2144
        %v2182 = vsub.f32 %v495, %v2152
        %v2183 = vsub.f32 %v496, %v2160
        %v2184 = vsub.f32 %v497, %v2168
        %v2185 = vmul.f32 %v2169, 1.442695
        %v2186 = vpow.pop %v2185
        %v2187 = vmul.f32 %v2170, 1.442695
        %v2188 = vpow.pop %v2187
        %v2189 = vmul.f32 %v2171, 1.442695
        %v2190 = vpow.pop %v2189
        %v2191 = vmul.f32 %v2172, 1.442695
        %v2192 = vpow.pop %v2191
        %v2193 = vmul.f32 %v2173, 1.442695
        %v2194 = vpow.pop %v2193
        %v2195 = vmul.f32 %v2174, 1.442695
        %v2196 = vpow.pop %v2195
        %v2197 = vmul.f32 %v2175, 1.442695
        %v2198 = vpow.pop %v2197
        %v2199 = vmul.f32 %v2176, 1.442695
        %v2200 = vpow.pop %v2199
        %v2201 = vmul.f32 %v2177, 1.442695
        %v2202 = vpow.pop %v2201
        %v2203 = vmul.f32 %v2178, 1.442695
        %v2204 = vpow.pop %v2203
        %v2205 = vmul.f32 %v2179, 1.442695
        %v2206 = vpow.pop %v2205
        %v2207 = vmul.f32 %v2180, 1.442695
        %v2208 = vpow.pop %v2207
        %v2209 = vmul.f32 %v2181, 1.442695
        %v2210 = vpow.pop %v2209
        %v2211 = vmul.f32 %v2182, 1.442695
        %v2212 = vpow.pop %v2211
        %v2213 = vmul.f32 %v2183, 1.442695
        %v2214 = vpow.pop %v2213
        %v2215 = vmul.f32 %v2184, 1.442695
        %v2216 = vpow.pop %v2215
        %v2217 = vsel %vm1904, %v2194, 0.0
        %v2218 = vadd.f32 %v2186, %v2217
        %v2219 = vrot.slane %v2218, 4
        %v2220 = vadd.f32 %v2218, %v2219
        %v2221 = vrot.slane %v2220, 2
        %v2222 = vadd.f32 %v2220, %v2221
        %v2223 = vrot.slane %v2222, 1
        %v2224 = vadd.f32 %v2222, %v2223
        %v2225 = vsel %vm1904, %v2196, 0.0
        %v2226 = vadd.f32 %v2188, %v2225
        %v2227 = vrot.slane %v2226, 4
        %v2228 = vadd.f32 %v2226, %v2227
        %v2229 = vrot.slane %v2228, 2
        %v2230 = vadd.f32 %v2228, %v2229
        %v2231 = vrot.slane %v2230, 1
        %v2232 = vadd.f32 %v2230, %v2231
        %v2233 = vsel %vm1904, %v2198, 0.0
        %v2234 = vadd.f32 %v2190, %v2233
        %v2235 = vrot.slane %v2234, 4
        %v2236 = vadd.f32 %v2234, %v2235
        %v2237 = vrot.slane %v2236, 2
        %v2238 = vadd.f32 %v2236, %v2237
        %v2239 = vrot.slane %v2238, 1
        %v2240 = vadd.f32 %v2238, %v2239
        %v2241 = vsel %vm1904, %v2200, 0.0
        %v2242 = vadd.f32 %v2192, %v2241
        %v2243 = vrot.slane %v2242, 4
        %v2244 = vadd.f32 %v2242, %v2243
        %v2245 = vrot.slane %v2244, 2
        %v2246 = vadd.f32 %v2244, %v2245
        %v2247 = vrot.slane %v2246, 1
        %v2248 = vadd.f32 %v2246, %v2247
        %v2249 = vsel %vm1904, %v2210, 0.0
        %v2250 = vadd.f32 %v2202, %v2249
        %v2251 = vrot.slane %v2250, 4
        %v2252 = vadd.f32 %v2250, %v2251
        %v2253 = vrot.slane %v2252, 2
        %v2254 = vadd.f32 %v2252, %v2253
        %v2255 = vrot.slane %v2254, 1
        %v2256 = vadd.f32 %v2254, %v2255
        %v2257 = vsel %vm1904, %v2212, 0.0
        %v2258 = vadd.f32 %v2204, %v2257
        %v2259 = vrot.slane %v2258, 4
        %v2260 = vadd.f32 %v2258, %v2259
        %v2261 = vrot.slane %v2260, 2
        %v2262 = vadd.f32 %v2260, %v2261
        %v2263 = vrot.slane %v2262, 1
        %v2264 = vadd.f32 %v2262, %v2263
        %v2265 = vsel %vm1904, %v2214, 0.0
        %v2266 = vadd.f32 %v2206, %v2265
        %v2267 = vrot.slane %v2266, 4
        %v2268 = vadd.f32 %v2266, %v2267
        %v2269 = vrot.slane %v2268, 2
        %v2270 = vadd.f32 %v2268, %v2269
        %v2271 = vrot.slane %v2270, 1
        %v2272 = vadd.f32 %v2270, %v2271
        %v2273 = vsel %vm1904, %v2216, 0.0
        %v2274 = vadd.f32 %v2208, %v2273
        %v2275 = vrot.slane %v2274, 4
        %v2276 = vadd.f32 %v2274, %v2275
        %v2277 = vrot.slane %v2276, 2
        %v2278 = vadd.f32 %v2276, %v2277
        %v2279 = vrot.slane %v2278, 1
        %v2280 = vadd.f32 %v2278, %v2279
        %v2281 = vlog2.pop %v2224
        %v2282 = vmul.f32 %v2281, 0.6931472
        %v2283 = vlog2.pop %v2232
        %v2284 = vmul.f32 %v2283, 0.6931472
        %v2285 = vlog2.pop %v2240
        %v2286 = vmul.f32 %v2285, 0.6931472
        %v2287 = vlog2.pop %v2248
        %v2288 = vmul.f32 %v2287, 0.6931472
        %v2289 = vlog2.pop %v2256
        %v2290 = vmul.f32 %v2289, 0.6931472
        %v2291 = vlog2.pop %v2264
        %v2292 = vmul.f32 %v2291, 0.6931472
        %v2293 = vlog2.pop %v2272
        %v2294 = vmul.f32 %v2293, 0.6931472
        %v2295 = vlog2.pop %v2280
        %v2296 = vmul.f32 %v2295, 0.6931472
        %v2297 = vadd.f32 %v2282, %v2112
        %v2298 = vadd.f32 %v2284, %v2120
        %v2299 = vadd.f32 %v2286, %v2128
        %v2300 = vadd.f32 %v2288, %v2136
        %v2301 = vadd.f32 %v2290, %v2144
        %v2302 = vadd.f32 %v2292, %v2152
        %v2303 = vadd.f32 %v2294, %v2160
        %v2304 = vadd.f32 %v2296, %v2168
        %v2305 = vsub.f32 %v2297, %v2097
        %v2306 = vsub.f32 %v2298, %v2098
        %v2307 = vsub.f32 %v2299, %v2099
        %v2308 = vsub.f32 %v2300, %v2100
        %v2309 = vsub.f32 %v2301, %v2101
        %v2310 = vsub.f32 %v2302, %v2102
        %v2311 = vsub.f32 %v2303, %v2103
        %v2312 = vsub.f32 %v2304, %v2104
        %vm2313 = vcmp.gt.f32.partialorder %v532, 0.5
        %vm2314 = vcmp.gt.f32.partialorder %v533, 0.5
        %v2323 = vrot.slane %v2306, 7
        %v2324 = vrot.slane %v2307, 6
        %v2325 = vrot.slane %v2308, 5
        %v2326 = vrot.slane %v2310, 7
        %v2327 = vrot.slane %v2311, 6
        %v2328 = vrot.slane %v2312, 5
        %vm2329 = vcmask 1040384
        %v2330 = vsel %vm2329, %v2305, %v2323
        %vm2331 = vcmask 1042434
        %v2332 = vsel %vm2331, %v2324, %v2325
        %v2333 = vsel %vm1904, %v2330, %v2332
        %v2334 = vsel %vm2329, %v2309, %v2326
        %v2335 = vsel %vm2331, %v2327, %v2328
        %v2336 = vsel %vm1904, %v2334, %v2335
        %v2339 = vsel %vm2313, %v2333, 0.0
        %v2340 = vsel %vm2314, %v2336, 0.0
        %v2341 = vld [vmem:[%s446] sm:$0xf]
        %v2342 = vld [vmem:[%s446 + $0x4] sm:$0xf]
        %v2343 = vadd.f32 %v2341, %v2339
        %v2344 = vadd.f32 %v2342, %v2340
        %v2345 = vlaneseq
        %vm2346 = vcmp.ge.s32.totalorder %v2345, 0
        %vm2347 = vcmp.lt.s32.totalorder %v2345, 512
        %vm2348 = vmand %vm2346, %vm2347
        %2349 = vst.msk [vmem:[%s446] sm:$0xf] %vm2348, %v2343
        %2350 = vst.msk [vmem:[%s446 + $0x4] sm:$0xf] %vm2348, %v2344
        %s2351 = sand.u32 %s127, 1
        %s2352 = scalar_lea.sflag [#allocation6], %s2351
        %s2353 = sand.u32 %s127, 1
        %s2354 = smul.addr %s2353, 8
        %s2355 = scalar_lea.vmem [#allocation5], %s2354
        // Predicated region
        $region142: #{tpu_custom_call.1} parent=124 // pred_check
          %p2356 = pneg %p137
        $region143: #{tpu_custom_call.1} parent=124 // pred_check_branch
          %2358 = sbr.rel (%p2356) target = $region145
        $region144: #{tpu_custom_call.1} parent=124 // pred_region
          %2360 = vsyncadd %s2352, 0
          %s2361 = smul.addr %s21, 8
          %s2362 = scalar_lea.hbm %s3, %s2361
          %s2363 = sshll.u32 %s2355, 4
          %s2364 = int_to_ptr.vmem [resolvable:$true] %s2363
          %s2365 = sshll.u32 %s2362, 4
          %s2366 = int_to_ptr.hbm [resolvable:$true] %s2365
          %2371 = dma.vmem_to_hbm [thread:$0]  %s2364, 128, %s2366, %s2352, 64, 64, 4
        $region145: #{tpu_custom_call.1} parent=124 // pred_fallthru
          _
      $region125: #{tpu_custom_call.1} parent=5 // pred_fallthru
        _
      %p2372 = scmp.le.s32.totalorder 2, %s12
      // Predicated region
      $region146: #{tpu_custom_call.1} parent=5 // pred_check
        %p2373 = pneg %p2372
      $region147: #{tpu_custom_call.1} parent=5 // pred_check_branch
        %2375 = sbr.rel (%p2373) target = $region149
      $region148: #{tpu_custom_call.1} parent=5 // pred_region
        %s2376 = ssub.s32 %s12, 2
        // Predicated region
        $region150: #{tpu_custom_call.1} parent=148 // pred_check
          %p2377 = pneg %p143
        $region151: #{tpu_custom_call.1} parent=148 // pred_check_branch
          %2379 = sbr.rel (%p2377) target = $region153
        $region152: #{tpu_custom_call.1} parent=148 // pred_region
          %s2380 = sand.u32 %s128, 1
          %s2381 = scalar_lea.sflag [#allocation6], %s2380
          %s2382 = sand.u32 %s128, 1
          %s2383 = smul.addr %s2382, 8
          %s2384 = scalar_lea.vmem [#allocation5], %s2383
          %2386 = dma.done %s2381, 128
        $region153: #{tpu_custom_call.1} parent=148 // pred_fallthru
          _
      $region149: #{tpu_custom_call.1} parent=5 // pred_fallthru
        _
    $region6: #{tpu_custom_call.1} parent=1 // loop_footer
      %s16 = sadd.s32 1, %s12
    $region7: #{tpu_custom_call.1} parent=1 // loop_footer_branch
      %11 = sbr.rel target = $region3
    $region8: #{tpu_custom_call.1} parent=1 // loop_exit
      _
    %2387 = vsyncpa [#allocation6], 1
    %s2388 = scalar_lea.sflag [#allocation6], 1
    %2389 = vsyncpa %s2388, 1

</llo_original>
